<compile_context>
chip_gen: v7x
topology: tpu7x:2x2x1
jax: 0.10.0
libtpu: 0.0.40
codegen_flags: <defaults>
</compile_context>

<pallas_src>
import functools

import jax
import jax.numpy as jnp
from jax import lax
from jax.experimental import pallas as pl
from jax.experimental.pallas import tpu as pltpu


def _pick_row_tile(oh, ow, target_rows=512):
    """Largest divisor of `oh` whose tile (rows * ow) stays near target_rows,
    preferring sublane-aligned (multiple of 8) row counts."""
    cap = max(1, target_rows // max(ow, 1))
    cands = [d for d in range(1, oh + 1)
             if oh % d == 0 and d <= cap and (d % 8 == 0 or d == oh)]
    return max(cands) if cands else oh


def _vmem_limit(nbytes):
    # Explicit scoped-VMEM budget: at least 16 MiB (v5e default), capped at
    # 48 MiB so the same budget also fits v7x's 64 MiB physical VMEM.
    return int(min(max(2 * nbytes + (2 << 20), 16 << 20), 48 << 20))


# ---------------------------------------------------------------------------
# Kernel 1: convolution (im2col staging + single MXU matmul) + partial stats
# ---------------------------------------------------------------------------
def _conv_stats_kernel(x_ref, w_ref, y_ref, ssum_ref, ssq_ref, pat_ref, *,
                       ksize, stride, th, ow, cin, cout):
    t = pl.program_id(1)          # output-row tile index within this batch item

    @pl.when(t == 0)
    def _init():
        ssum_ref[...] = jnp.zeros_like(ssum_ref)
        ssq_ref[...] = jnp.zeros_like(ssq_ref)

    row0 = t * (th * stride)
    if (th * stride) % 8 == 0:
        row0 = pl.multiple_of(row0, 8)

    # im2col staging: lay the k*k shifted windows side-by-side along the
    # contraction axis so the conv becomes one matmul with K = k*k*Cin.
    for dh in range(ksize):
        for dw in range(ksize):
            if stride == 1:
                p = x_ref[pl.ds(row0 + dh, th), pl.ds(dw, ow), :]
            else:
                win = x_ref[pl.ds(row0 + dh, (th - 1) * stride + 1),
                            pl.ds(dw, (ow - 1) * stride + 1), :]
                p = win[::stride, ::stride, :]
            c0 = (dh * ksize + dw) * cin
            pat_ref[:, :, c0:c0 + cin] = p

    tm = th * ow
    kkc = ksize * ksize * cin
    patches = pat_ref[...].reshape(tm, kkc)         # minor dim unchanged

    # Single fused conv matmul; operands stay in the input dtype, f32 accumulate.
    acc = jnp.dot(patches, w_ref[...], preferred_element_type=jnp.float32)

    # Per-tile channel sum / sum-of-squares via ones-row matmuls (MXU),
    # accumulated across the 'arbitrary' row-tile axis into per-batch blocks.
    ones_row = jnp.ones((1, tm), jnp.float32)
    ssum_ref[...] += jnp.dot(ones_row, acc, preferred_element_type=jnp.float32)
    ssq_ref[...] += jnp.dot(ones_row, acc * acc, preferred_element_type=jnp.float32)

    y_ref[...] = acc.astype(y_ref.dtype)


# ---------------------------------------------------------------------------
# Kernel 2: folded BatchNorm affine + LeakyReLU (lane-dense elementwise pass)
# ---------------------------------------------------------------------------
def _bn_lrelu_kernel(y_ref, scale_ref, shift_ref, o_ref, *, neg_slope):
    z = y_ref[...] * scale_ref[...] + shift_ref[...]
    o_ref[...] = jnp.where(z >= 0, z, neg_slope * z).astype(o_ref.dtype)


def cbl_forward(x_nchw, weight_oihw, gamma, beta, *, stride=1,
                eps=1e-5, neg_slope=0.01):
    n, cin, h, w = x_nchw.shape
    cout, cin2, k, k2 = weight_oihw.shape
    assert cin == cin2 and k == k2
    pad = (k - 1) // 2
    oh = (h + 2 * pad - k) // stride + 1
    ow = (w + 2 * pad - k) // stride + 1
    hp, wp = h + 2 * pad, w + 2 * pad

    # ---- wrapper glue: layout conversion + padding + weight flattening
    x_nhwc = jnp.transpose(x_nchw, (0, 2, 3, 1))
    x_pad = jnp.pad(x_nhwc, ((0, 0), (pad, pad), (pad, pad), (0, 0)))
    # (Cout, Cin, k, k) -> (k, k, Cin, Cout) -> (k*k*Cin, Cout); tap-major /
    # channel-minor, matching the in-kernel im2col staging order.
    w_mat = jnp.transpose(weight_oihw, (2, 3, 1, 0)).reshape(k * k * cin, cout)

    th = _pick_row_tile(oh, ow)
    n_t = oh // th
    tm = th * ow
    kkc = k * k * cin
    owc = ow * cout
    m_total = n * oh * ow
    isz = x_pad.dtype.itemsize

    # ------------------- pass 1: conv + partial statistics -------------------
    vmem1 = _vmem_limit(2 * hp * wp * cin * isz + 2 * kkc * cout * isz
                        + 2 * tm * cout * 4 + tm * kkc * isz)
    cost1 = pl.CostEstimate(
        flops=2 * m_total * kkc * cout + 4 * m_total * cout,
        transcendentals=0,
        bytes_accessed=(x_pad.size + w_mat.size) * isz + m_total * cout * 4)

    y_flat, psum, psq = pl.pallas_call(
        functools.partial(_conv_stats_kernel, ksize=k, stride=stride,
                          th=th, ow=ow, cin=cin, cout=cout),
        grid=(n, n_t),
        in_specs=[
            pl.BlockSpec((None, hp, wp, cin), lambda b, t: (b, 0, 0, 0)),
            pl.BlockSpec((kkc, cout), lambda b, t: (0, 0)),
        ],
        out_specs=(
            pl.BlockSpec((tm, cout), lambda b, t: (b * n_t + t, 0)),
            pl.BlockSpec((None, 1, cout), lambda b, t: (b, 0, 0)),
            pl.BlockSpec((None, 1, cout), lambda b, t: (b, 0, 0)),
        ),
        out_shape=(
            jax.ShapeDtypeStruct((m_total, cout), jnp.float32),
            jax.ShapeDtypeStruct((n, 1, cout), jnp.float32),
            jax.ShapeDtypeStruct((n, 1, cout), jnp.float32),
        ),
        scratch_shapes=[pltpu.VMEM((th, ow, kkc), x_pad.dtype)],
        compiler_params=pltpu.CompilerParams(
            dimension_semantics=("parallel", "arbitrary"),
            vmem_limit_bytes=vmem1),
        cost_estimate=cost1,
    )(x_pad, w_mat)

    # ---- fold BN statistics into per-channel scale/shift (O(Cout) glue).
    # Training-mode BatchNorm: biased variance over the whole batch.
    # TODO(synk): running_mean/running_var buffer updates (module side effect)
    # are not modeled; only the forward output tensor is produced.
    cnt = jnp.float32(m_total)
    mean = jnp.sum(psum, axis=(0, 1)) / cnt                      # (Cout,)
    var = jnp.maximum(jnp.sum(psq, axis=(0, 1)) / cnt - mean * mean, 0.0)
    inv_std = lax.rsqrt(var + eps)
    scale = gamma.reshape(-1).astype(jnp.float32) * inv_std
    shift = beta.reshape(-1).astype(jnp.float32) - mean * scale
    scale_row = jnp.tile(scale, ow).reshape(1, owc)              # lane-dense rows
    shift_row = jnp.tile(shift, ow).reshape(1, owc)

    # ------------------- pass 2: BN affine + LeakyReLU -----------------------
    y2d = y_flat.reshape(n * oh, owc)        # free row-major reshape in HBM
    vmem2 = _vmem_limit(6 * th * owc * 4)
    cost2 = pl.CostEstimate(flops=3 * m_total * cout, transcendentals=0,
                            bytes_accessed=2 * m_total * cout * 4 + 2 * owc * 4)

    out2d = pl.pallas_call(
        functools.partial(_bn_lrelu_kernel, neg_slope=neg_slope),
        grid=(n * n_t,),
        in_specs=[
            pl.BlockSpec((th, owc), lambda i: (i, 0)),
            pl.BlockSpec((1, owc), lambda i: (0, 0)),
            pl.BlockSpec((1, owc), lambda i: (0, 0)),
        ],
        out_specs=pl.BlockSpec((th, owc), lambda i: (i, 0)),
        out_shape=jax.ShapeDtypeStruct((n * oh, owc), x_nchw.dtype),
        compiler_params=pltpu.CompilerParams(
            dimension_semantics=("parallel",),
            vmem_limit_bytes=vmem2),
        cost_estimate=cost2,
    )(y2d, scale_row, shift_row)

    out_nhwc = out2d.reshape(n, oh, ow, cout)
    return jnp.transpose(out_nhwc, (0, 3, 1, 2))                 # back to NCHW


def cbl_reference(x, w, gamma, beta, *, stride=1, eps=1e-5, neg_slope=0.01):
    """Pure-JAX reference matching PyTorch CBL.forward (module in train mode)."""
    k = w.shape[-1]
    pad = (k - 1) // 2
    y = lax.conv_general_dilated(
        x, w, window_strides=(stride, stride),
        padding=((pad, pad), (pad, pad)),
        dimension_numbers=('NCHW', 'OIHW', 'NCHW'))
    mean = y.mean(axis=(0, 2, 3), keepdims=True)
    var = ((y - mean) ** 2).mean(axis=(0, 2, 3), keepdims=True)
    yn = (y - mean) / jnp.sqrt(var + eps)
    yn = yn * gamma.reshape(1, -1, 1, 1) + beta.reshape(1, -1, 1, 1)
    return jnp.where(yn >= 0, yn, neg_slope * yn)


if __name__ == "__main__":
    # Small shapes consistent with CBL(conv_dim1=8, conv_dim2=16, kernel_size=3, stride=1)
    N, CIN, COUT, H, W, K, STRIDE = 2, 8, 16, 16, 16, 3, 1

    key = jax.random.PRNGKey(0)
    kx, kw, kg, kb = jax.random.split(key, 4)
    x = jax.random.normal(kx, (N, CIN, H, W), dtype=jnp.float32)
    weight = 0.1 * jax.random.normal(kw, (COUT, CIN, K, K), dtype=jnp.float32)
    gamma = 1.0 + 0.1 * jax.random.normal(kg, (COUT,), dtype=jnp.float32)
    beta = 0.1 * jax.random.normal(kb, (COUT,), dtype=jnp.float32)

    fwd = jax.jit(functools.partial(cbl_forward, stride=STRIDE))
    out = jax.block_until_ready(fwd(x, weight, gamma, beta))

    ref = jax.block_until_ready(cbl_reference(x, weight, gamma, beta, stride=STRIDE))
    assert out.shape == ref.shape == (N, COUT, H, W)
    err = float(jnp.max(jnp.abs(out - ref)))
    assert err < 2e-3, f"mismatch vs reference: {err}"

    print("KERNEL_OK")
</pallas_src>

<mosaic_0001>
module attributes {stable_mosaic.version = 11 : i64} {
  func.func @_conv_stats_kernel(%arg0: i32, %arg1: i32, %arg2: memref<1x18x18x8xf32, #tpu.memory_space<vmem>>, %arg3: memref<72x16xf32, #tpu.memory_space<vmem>>, %arg4: memref<256x16xf32, #tpu.memory_space<vmem>>, %arg5: memref<1x1x16xf32, #tpu.memory_space<vmem>>, %arg6: memref<1x1x16xf32, #tpu.memory_space<vmem>>, %arg7: memref<16x16x72xf32, #tpu.memory_space<vmem>>) attributes {dimension_semantics = [#tpu.dimension_semantics<parallel>, #tpu.dimension_semantics<arbitrary>], iteration_bounds = array<i64: 2, 1>, scalar_prefetch = 0 : i64, scratch_operands = 1 : i64, tpu.core_type = #tpu.core_type<tc>, window_params = [{transform_indices = @transform_0, window_bounds = array<i64: 1, 18, 18, 8>}, {pipeline_mode = #tpu.pipeline_mode<synchronous>, transform_indices = @transform_1, window_bounds = array<i64: 72, 16>}, {transform_indices = @transform_2, window_bounds = array<i64: 256, 16>}, {transform_indices = @transform_3, window_bounds = array<i64: 1, 1, 16>}, {transform_indices = @transform_4, window_bounds = array<i64: 1, 1, 16>}]} {
    %c0_i32 = arith.constant 0 : i32
    %0 = arith.cmpi eq, %arg1, %c0_i32 : i32
    %1 = arith.extui %0 : i1 to i32
    %c0_i32_0 = arith.constant 0 : i32
    %2 = arith.cmpi ne, %1, %c0_i32_0 : i32
    scf.if %2 {
      %cst_73 = arith.constant 0.000000e+00 : f32
      %71 = vector.broadcast %cst_73 : f32 to vector<1x16xf32>
      %c0_74 = arith.constant 0 : index
      %c0_75 = arith.constant 0 : index
      %c0_76 = arith.constant 0 : index
      %72 = vector.load %arg5[%c0_74, %c0_75, %c0_76] : memref<1x1x16xf32, #tpu.memory_space<vmem>>, vector<1x1x16xf32>
      %73 = vector.shape_cast %72 : vector<1x1x16xf32> to vector<1x16xf32>
      %74 = vector.shape_cast %71 : vector<1x16xf32> to vector<1x1x16xf32>
      tpu.vector_store %arg5[%c0_74, %c0_75, %c0_76], %74 {strides = array<i32>} : memref<1x1x16xf32, #tpu.memory_space<vmem>>, vector<1x1x16xf32>,
      %cst_77 = arith.constant 0.000000e+00 : f32
      %75 = vector.broadcast %cst_77 : f32 to vector<1x16xf32>
      %c0_78 = arith.constant 0 : index
      %c0_79 = arith.constant 0 : index
      %c0_80 = arith.constant 0 : index
      %76 = vector.load %arg6[%c0_78, %c0_79, %c0_80] : memref<1x1x16xf32, #tpu.memory_space<vmem>>, vector<1x1x16xf32>
      %77 = vector.shape_cast %76 : vector<1x1x16xf32> to vector<1x16xf32>
      %78 = vector.shape_cast %75 : vector<1x16xf32> to vector<1x1x16xf32>
      tpu.vector_store %arg6[%c0_78, %c0_79, %c0_80], %78 {strides = array<i32>} : memref<1x1x16xf32, #tpu.memory_space<vmem>>, vector<1x1x16xf32>,
    } else {
    }
    %c16_i32 = arith.constant 16 : i32
    %3 = arith.muli %arg1, %c16_i32 : i32
    %4 = tpu.assume_multiple %3, 8 : i32
    %c0_i32_1 = arith.constant 0 : i32
    %5 = arith.addi %4, %c0_i32_1 : i32
    %c0 = arith.constant 0 : index
    %6 = arith.index_cast %5 : i32 to index
    %c0_2 = arith.constant 0 : index
    %c0_3 = arith.constant 0 : index
    %7 = vector.load %arg2[%c0, %6, %c0_2, %c0_3] : memref<1x18x18x8xf32, #tpu.memory_space<vmem>>, vector<1x16x16x8xf32>
    %8 = vector.shape_cast %7 : vector<1x16x16x8xf32> to vector<16x16x8xf32>
    %c0_4 = arith.constant 0 : index
    %c0_5 = arith.constant 0 : index
    %c0_6 = arith.constant 0 : index
    %9 = vector.load %arg7[%c0_4, %c0_5, %c0_6] : memref<16x16x72xf32, #tpu.memory_space<vmem>>, vector<16x16x8xf32>
    tpu.vector_store %arg7[%c0_4, %c0_5, %c0_6], %8 {strides = array<i32>} : memref<16x16x72xf32, #tpu.memory_space<vmem>>, vector<16x16x8xf32>,
    %c0_i32_7 = arith.constant 0 : i32
    %10 = arith.addi %4, %c0_i32_7 : i32
    %c0_8 = arith.constant 0 : index
    %11 = arith.index_cast %10 : i32 to index
    %c1 = arith.constant 1 : index
    %c0_9 = arith.constant 0 : index
    %12 = vector.load %arg2[%c0_8, %11, %c1, %c0_9] : memref<1x18x18x8xf32, #tpu.memory_space<vmem>>, vector<1x16x16x8xf32>
    %13 = vector.shape_cast %12 : vector<1x16x16x8xf32> to vector<16x16x8xf32>
    %c0_10 = arith.constant 0 : index
    %c0_11 = arith.constant 0 : index
    %c8 = arith.constant 8 : index
    %14 = vector.load %arg7[%c0_10, %c0_11, %c8] : memref<16x16x72xf32, #tpu.memory_space<vmem>>, vector<16x16x8xf32>
    tpu.vector_store %arg7[%c0_10, %c0_11, %c8], %13 {strides = array<i32>} : memref<16x16x72xf32, #tpu.memory_space<vmem>>, vector<16x16x8xf32>,
    %c0_i32_12 = arith.constant 0 : i32
    %15 = arith.addi %4, %c0_i32_12 : i32
    %c0_13 = arith.constant 0 : index
    %16 = arith.index_cast %15 : i32 to index
    %c2 = arith.constant 2 : index
    %c0_14 = arith.constant 0 : index
    %17 = vector.load %arg2[%c0_13, %16, %c2, %c0_14] : memref<1x18x18x8xf32, #tpu.memory_space<vmem>>, vector<1x16x16x8xf32>
    %18 = vector.shape_cast %17 : vector<1x16x16x8xf32> to vector<16x16x8xf32>
    %c0_15 = arith.constant 0 : index
    %c0_16 = arith.constant 0 : index
    %c16 = arith.constant 16 : index
    %19 = vector.load %arg7[%c0_15, %c0_16, %c16] : memref<16x16x72xf32, #tpu.memory_space<vmem>>, vector<16x16x8xf32>
    tpu.vector_store %arg7[%c0_15, %c0_16, %c16], %18 {strides = array<i32>} : memref<16x16x72xf32, #tpu.memory_space<vmem>>, vector<16x16x8xf32>,
    %c1_i32 = arith.constant 1 : i32
    %20 = arith.addi %4, %c1_i32 : i32
    %c0_17 = arith.constant 0 : index
    %21 = arith.index_cast %20 : i32 to index
    %c0_18 = arith.constant 0 : index
    %c0_19 = arith.constant 0 : index
    %22 = vector.load %arg2[%c0_17, %21, %c0_18, %c0_19] : memref<1x18x18x8xf32, #tpu.memory_space<vmem>>, vector<1x16x16x8xf32>
    %23 = vector.shape_cast %22 : vector<1x16x16x8xf32> to vector<16x16x8xf32>
    %c0_20 = arith.constant 0 : index
    %c0_21 = arith.constant 0 : index
    %c24 = arith.constant 24 : index
    %24 = vector.load %arg7[%c0_20, %c0_21, %c24] : memref<16x16x72xf32, #tpu.memory_space<vmem>>, vector<16x16x8xf32>
    tpu.vector_store %arg7[%c0_20, %c0_21, %c24], %23 {strides = array<i32>} : memref<16x16x72xf32, #tpu.memory_space<vmem>>, vector<16x16x8xf32>,
    %c1_i32_22 = arith.constant 1 : i32
    %25 = arith.addi %4, %c1_i32_22 : i32
    %c0_23 = arith.constant 0 : index
    %26 = arith.index_cast %25 : i32 to index
    %c1_24 = arith.constant 1 : index
    %c0_25 = arith.constant 0 : index
    %27 = vector.load %arg2[%c0_23, %26, %c1_24, %c0_25] : memref<1x18x18x8xf32, #tpu.memory_space<vmem>>, vector<1x16x16x8xf32>
    %28 = vector.shape_cast %27 : vector<1x16x16x8xf32> to vector<16x16x8xf32>
    %c0_26 = arith.constant 0 : index
    %c0_27 = arith.constant 0 : index
    %c32 = arith.constant 32 : index
    %29 = vector.load %arg7[%c0_26, %c0_27, %c32] : memref<16x16x72xf32, #tpu.memory_space<vmem>>, vector<16x16x8xf32>
    tpu.vector_store %arg7[%c0_26, %c0_27, %c32], %28 {strides = array<i32>} : memref<16x16x72xf32, #tpu.memory_space<vmem>>, vector<16x16x8xf32>,
    %c1_i32_28 = arith.constant 1 : i32
    %30 = arith.addi %4, %c1_i32_28 : i32
    %c0_29 = arith.constant 0 : index
    %31 = arith.index_cast %30 : i32 to index
    %c2_30 = arith.constant 2 : index
    %c0_31 = arith.constant 0 : index
    %32 = vector.load %arg2[%c0_29, %31, %c2_30, %c0_31] : memref<1x18x18x8xf32, #tpu.memory_space<vmem>>, vector<1x16x16x8xf32>
    %33 = vector.shape_cast %32 : vector<1x16x16x8xf32> to vector<16x16x8xf32>
    %c0_32 = arith.constant 0 : index
    %c0_33 = arith.constant 0 : index
    %c40 = arith.constant 40 : index
    %34 = vector.load %arg7[%c0_32, %c0_33, %c40] : memref<16x16x72xf32, #tpu.memory_space<vmem>>, vector<16x16x8xf32>
    tpu.vector_store %arg7[%c0_32, %c0_33, %c40], %33 {strides = array<i32>} : memref<16x16x72xf32, #tpu.memory_space<vmem>>, vector<16x16x8xf32>,
    %c2_i32 = arith.constant 2 : i32
    %35 = arith.addi %4, %c2_i32 : i32
    %c0_34 = arith.constant 0 : index
    %36 = arith.index_cast %35 : i32 to index
    %c0_35 = arith.constant 0 : index
    %c0_36 = arith.constant 0 : index
    %37 = vector.load %arg2[%c0_34, %36, %c0_35, %c0_36] : memref<1x18x18x8xf32, #tpu.memory_space<vmem>>, vector<1x16x16x8xf32>
    %38 = vector.shape_cast %37 : vector<1x16x16x8xf32> to vector<16x16x8xf32>
    %c0_37 = arith.constant 0 : index
    %c0_38 = arith.constant 0 : index
    %c48 = arith.constant 48 : index
    %39 = vector.load %arg7[%c0_37, %c0_38, %c48] : memref<16x16x72xf32, #tpu.memory_space<vmem>>, vector<16x16x8xf32>
    tpu.vector_store %arg7[%c0_37, %c0_38, %c48], %38 {strides = array<i32>} : memref<16x16x72xf32, #tpu.memory_space<vmem>>, vector<16x16x8xf32>,
    %c2_i32_39 = arith.constant 2 : i32
    %40 = arith.addi %4, %c2_i32_39 : i32
    %c0_40 = arith.constant 0 : index
    %41 = arith.index_cast %40 : i32 to index
    %c1_41 = arith.constant 1 : index
    %c0_42 = arith.constant 0 : index
    %42 = vector.load %arg2[%c0_40, %41, %c1_41, %c0_42] : memref<1x18x18x8xf32, #tpu.memory_space<vmem>>, vector<1x16x16x8xf32>
    %43 = vector.shape_cast %42 : vector<1x16x16x8xf32> to vector<16x16x8xf32>
    %c0_43 = arith.constant 0 : index
    %c0_44 = arith.constant 0 : index
    %c56 = arith.constant 56 : index
    %44 = vector.load %arg7[%c0_43, %c0_44, %c56] : memref<16x16x72xf32, #tpu.memory_space<vmem>>, vector<16x16x8xf32>
    tpu.vector_store %arg7[%c0_43, %c0_44, %c56], %43 {strides = array<i32>} : memref<16x16x72xf32, #tpu.memory_space<vmem>>, vector<16x16x8xf32>,
    %c2_i32_45 = arith.constant 2 : i32
    %45 = arith.addi %4, %c2_i32_45 : i32
    %c0_46 = arith.constant 0 : index
    %46 = arith.index_cast %45 : i32 to index
    %c2_47 = arith.constant 2 : index
    %c0_48 = arith.constant 0 : index
    %47 = vector.load %arg2[%c0_46, %46, %c2_47, %c0_48] : memref<1x18x18x8xf32, #tpu.memory_space<vmem>>, vector<1x16x16x8xf32>
    %48 = vector.shape_cast %47 : vector<1x16x16x8xf32> to vector<16x16x8xf32>
    %c0_49 = arith.constant 0 : index
    %c0_50 = arith.constant 0 : index
    %c64 = arith.constant 64 : index
    %49 = vector.load %arg7[%c0_49, %c0_50, %c64] : memref<16x16x72xf32, #tpu.memory_space<vmem>>, vector<16x16x8xf32>
    tpu.vector_store %arg7[%c0_49, %c0_50, %c64], %48 {strides = array<i32>} : memref<16x16x72xf32, #tpu.memory_space<vmem>>, vector<16x16x8xf32>,
    %c0_51 = arith.constant 0 : index
    %c0_52 = arith.constant 0 : index
    %c0_53 = arith.constant 0 : index
    %50 = vector.load %arg7[%c0_51, %c0_52, %c0_53] : memref<16x16x72xf32, #tpu.memory_space<vmem>>, vector<16x16x72xf32>
    %51 = vector.shape_cast %50 : vector<16x16x72xf32> to vector<256x72xf32>
    %c0_54 = arith.constant 0 : index
    %c0_55 = arith.constant 0 : index
    %52 = vector.load %arg3[%c0_54, %c0_55] : memref<72x16xf32, #tpu.memory_space<vmem>>, vector<72x16xf32>
    %cst = arith.constant dense<0.000000e+00> : vector<256x16xf32>
    %53 = tpu.matmul %51, %52, %cst {dimension_numbers = #tpu.dot_dimension_numbers<[1], [0], [0], [1], [0, 0, 1, 1], [], []>} : vector<256x72xf32>, vector<72x16xf32>, vector<256x16xf32> -> vector<256x16xf32>
    %cst_56 = arith.constant 1.000000e+00 : f32
    %54 = vector.broadcast %cst_56 : f32 to vector<1x256xf32>
    %c0_57 = arith.constant 0 : index
    %c0_58 = arith.constant 0 : index
    %c0_59 = arith.constant 0 : index
    %55 = vector.load %arg5[%c0_57, %c0_58, %c0_59] : memref<1x1x16xf32, #tpu.memory_space<vmem>>, vector<1x1x16xf32>
    %56 = vector.shape_cast %55 : vector<1x1x16xf32> to vector<1x16xf32>
    %cst_60 = arith.constant dense<0.000000e+00> : vector<1x16xf32>
    %57 = tpu.matmul %54, %53, %cst_60 {dimension_numbers = #tpu.dot_dimension_numbers<[1], [0], [0], [1], [0, 0, 1, 1], [], []>} : vector<1x256xf32>, vector<256x16xf32>, vector<1x16xf32> -> vector<1x16xf32>
    %58 = arith.addf %56, %57 : vector<1x16xf32>
    %c0_61 = arith.constant 0 : index
    %c0_62 = arith.constant 0 : index
    %c0_63 = arith.constant 0 : index
    %59 = vector.load %arg5[%c0_61, %c0_62, %c0_63] : memref<1x1x16xf32, #tpu.memory_space<vmem>>, vector<1x1x16xf32>
    %60 = vector.shape_cast %59 : vector<1x1x16xf32> to vector<1x16xf32>
    %61 = vector.shape_cast %58 : vector<1x16xf32> to vector<1x1x16xf32>
    tpu.vector_store %arg5[%c0_61, %c0_62, %c0_63], %61 {strides = array<i32>} : memref<1x1x16xf32, #tpu.memory_space<vmem>>, vector<1x1x16xf32>,
    %c0_64 = arith.constant 0 : index
    %c0_65 = arith.constant 0 : index
    %c0_66 = arith.constant 0 : index
    %62 = vector.load %arg6[%c0_64, %c0_65, %c0_66] : memref<1x1x16xf32, #tpu.memory_space<vmem>>, vector<1x1x16xf32>
    %63 = vector.shape_cast %62 : vector<1x1x16xf32> to vector<1x16xf32>
    %64 = arith.mulf %53, %53 : vector<256x16xf32>
    %cst_67 = arith.constant dense<0.000000e+00> : vector<1x16xf32>
    %65 = tpu.matmul %54, %64, %cst_67 {dimension_numbers = #tpu.dot_dimension_numbers<[1], [0], [0], [1], [0, 0, 1, 1], [], []>} : vector<1x256xf32>, vector<256x16xf32>, vector<1x16xf32> -> vector<1x16xf32>
    %66 = arith.addf %63, %65 : vector<1x16xf32>
    %c0_68 = arith.constant 0 : index
    %c0_69 = arith.constant 0 : index
    %c0_70 = arith.constant 0 : index
    %67 = vector.load %arg6[%c0_68, %c0_69, %c0_70] : memref<1x1x16xf32, #tpu.memory_space<vmem>>, vector<1x1x16xf32>
    %68 = vector.shape_cast %67 : vector<1x1x16xf32> to vector<1x16xf32>
    %69 = vector.shape_cast %66 : vector<1x16xf32> to vector<1x1x16xf32>
    tpu.vector_store %arg6[%c0_68, %c0_69, %c0_70], %69 {strides = array<i32>} : memref<1x1x16xf32, #tpu.memory_space<vmem>>, vector<1x1x16xf32>,
    %c0_71 = arith.constant 0 : index
    %c0_72 = arith.constant 0 : index
    %70 = vector.load %arg4[%c0_71, %c0_72] : memref<256x16xf32, #tpu.memory_space<vmem>>, vector<256x16xf32>
    tpu.vector_store %arg4[%c0_71, %c0_72], %53 {strides = array<i32>} : memref<256x16xf32, #tpu.memory_space<vmem>>, vector<256x16xf32>,
    return
  }
  func.func @transform_0(%arg0: i32, %arg1: i32) -> (i32, i32, i32, i32) {
    %c0_i32 = arith.constant 0 : i32
    %c0_i32_0 = arith.constant 0 : i32
    %c0_i32_1 = arith.constant 0 : i32
    %c0_i32_2 = arith.constant 0 : i32
    return %arg0, %c0_i32, %c0_i32_0, %c0_i32_1 : i32, i32, i32, i32
  }
  func.func @transform_1(%arg0: i32, %arg1: i32) -> (i32, i32) {
    %c0_i32 = arith.constant 0 : i32
    %c0_i32_0 = arith.constant 0 : i32
    %c0_i32_1 = arith.constant 0 : i32
    return %c0_i32, %c0_i32_0 : i32, i32
  }
  func.func @transform_2(%arg0: i32, %arg1: i32) -> (i32, i32) {
    %c1_i32 = arith.constant 1 : i32
    %0 = arith.muli %arg0, %c1_i32 : i32
    %1 = arith.addi %0, %arg1 : i32
    %c0_i32 = arith.constant 0 : i32
    %c0_i32_0 = arith.constant 0 : i32
    return %1, %c0_i32 : i32, i32
  }
  func.func @transform_3(%arg0: i32, %arg1: i32) -> (i32, i32, i32) {
    %c0_i32 = arith.constant 0 : i32
    %c0_i32_0 = arith.constant 0 : i32
    %c0_i32_1 = arith.constant 0 : i32
    return %arg0, %c0_i32, %c0_i32_0 : i32, i32, i32
  }
  func.func @transform_4(%arg0: i32, %arg1: i32) -> (i32, i32, i32) {
    %c0_i32 = arith.constant 0 : i32
    %c0_i32_0 = arith.constant 0 : i32
    %c0_i32_1 = arith.constant 0 : i32
    return %arg0, %c0_i32, %c0_i32_0 : i32, i32, i32
  }
}

module attributes {stable_mosaic.version = 11 : i64} {
  func.func @_bn_lrelu_kernel(%arg0: i32, %arg1: memref<16x256xf32, #tpu.memory_space<vmem>>, %arg2: memref<1x256xf32, #tpu.memory_space<vmem>>, %arg3: memref<1x256xf32, #tpu.memory_space<vmem>>, %arg4: memref<16x256xf32, #tpu.memory_space<vmem>>) attributes {dimension_semantics = [#tpu.dimension_semantics<parallel>], iteration_bounds = array<i64: 2>, scalar_prefetch = 0 : i64, scratch_operands = 0 : i64, tpu.core_type = #tpu.core_type<tc>, window_params = [{transform_indices = @transform_0, window_bounds = array<i64: 16, 256>}, {pipeline_mode = #tpu.pipeline_mode<synchronous>, transform_indices = @transform_1, window_bounds = array<i64: 1, 256>}, {pipeline_mode = #tpu.pipeline_mode<synchronous>, transform_indices = @transform_2, window_bounds = array<i64: 1, 256>}, {transform_indices = @transform_3, window_bounds = array<i64: 16, 256>}]} {
    %c0 = arith.constant 0 : index
    %c0_0 = arith.constant 0 : index
    %0 = vector.load %arg1[%c0, %c0_0] : memref<16x256xf32, #tpu.memory_space<vmem>>, vector<16x256xf32>
    %c0_1 = arith.constant 0 : index
    %c0_2 = arith.constant 0 : index
    %1 = vector.load %arg2[%c0_1, %c0_2] : memref<1x256xf32, #tpu.memory_space<vmem>>, vector<1x256xf32>
    %2 = vector.broadcast %1 : vector<1x256xf32> to vector<16x256xf32>
    %3 = arith.mulf %0, %2 : vector<16x256xf32>
    %c0_3 = arith.constant 0 : index
    %c0_4 = arith.constant 0 : index
    %4 = vector.load %arg3[%c0_3, %c0_4] : memref<1x256xf32, #tpu.memory_space<vmem>>, vector<1x256xf32>
    %5 = vector.broadcast %4 : vector<1x256xf32> to vector<16x256xf32>
    %6 = arith.addf %3, %5 : vector<16x256xf32>
    %cst = arith.constant 0.000000e+00 : f32
    %7 = vector.broadcast %cst : f32 to vector<16x256xf32>
    %8 = arith.cmpf oge, %6, %7 : vector<16x256xf32>
    %cst_5 = arith.constant 0.00999999977 : f32
    %9 = vector.broadcast %cst_5 : f32 to vector<16x256xf32>
    %10 = arith.mulf %9, %6 : vector<16x256xf32>
    %11 = arith.select %8, %6, %10 : vector<16x256xi1>, vector<16x256xf32>
    %c0_6 = arith.constant 0 : index
    %c0_7 = arith.constant 0 : index
    %12 = vector.load %arg4[%c0_6, %c0_7] : memref<16x256xf32, #tpu.memory_space<vmem>>, vector<16x256xf32>
    tpu.vector_store %arg4[%c0_6, %c0_7], %11 {strides = array<i32>} : memref<16x256xf32, #tpu.memory_space<vmem>>, vector<16x256xf32>,
    return
  }
  func.func @transform_0(%arg0: i32) -> (i32, i32) {
    %c0_i32 = arith.constant 0 : i32
    %c0_i32_0 = arith.constant 0 : i32
    return %arg0, %c0_i32 : i32, i32
  }
  func.func @transform_1(%arg0: i32) -> (i32, i32) {
    %c0_i32 = arith.constant 0 : i32
    %c0_i32_0 = arith.constant 0 : i32
    %c0_i32_1 = arith.constant 0 : i32
    return %c0_i32, %c0_i32_0 : i32, i32
  }
  func.func @transform_2(%arg0: i32) -> (i32, i32) {
    %c0_i32 = arith.constant 0 : i32
    %c0_i32_0 = arith.constant 0 : i32
    %c0_i32_1 = arith.constant 0 : i32
    return %c0_i32, %c0_i32_0 : i32, i32
  }
  func.func @transform_3(%arg0: i32) -> (i32, i32) {
    %c0_i32 = arith.constant 0 : i32
    %c0_i32_0 = arith.constant 0 : i32
    return %arg0, %c0_i32 : i32, i32
  }
}

</mosaic_0001>

<llo_original>
// kernel: tile.18
$region0: #{tile.18}
  #allocation0 [shape = 's32[1]{0}', space=sflag, size = 0x4, scoped, tag = 'scoped memory for tile.18']
  %s0 = inlined_call_operand.vmem [shape: f32[16], index: 0, kind: input, shape index: {}]
  %s1 = inlined_call_operand.vmem [shape: f32[16,16], index: 1, kind: output, shape index: {}]
  // Predicated region
  $region2: #{tile.18} parent=0 // pred_check
    _
  $region3: #{tile.18} parent=0 // pred_check_branch
    %3 = sbr.rel (0) target = $region5
  $region4: #{tile.18} parent=0 // pred_region
    _
  $region5: #{tile.18} parent=0 // pred_fallthru
    _
  %v4 = vld [vmem:[%s0] ss:$0 sm:$0xff]
  %5 = vst [vmem:[%s1] sm:$0xff] %v4
  %s6 = scalar_lea.vmem %s1, 8
  %7 = vst [vmem:[%s6] sm:$0xff] %v4

// kernel: tile.19
$region0: #{tile.19}
  %s0 = inlined_call_operand.vmem [shape: f32[16,16], index: 0, kind: input, shape index: {}]
  %s1 = inlined_call_operand.vmem [shape: f32[1,256], index: 1, kind: output, shape index: {}]
  $region1: #{tile.19} parent=0
    #allocation0 [shape = 'u8[8192]{0}', space=vmem, size = 0x2000, scoped, tag = 'scoped mem for output reshape']
    %s2 = smov 3
    %v3 = vld [vmem:[%s0] ss:$8 sm:%s2]
    %vm4 = vcmask 130048
    %5 = vst.msk [vmem:[#allocation0] ss:$8 sm:$0x3] %vm4, %v3
    %s6 = scalar_lea.vmem %s0, 7
    %s7 = smov 3
    %v8 = vld [vmem:[%s6] ss:$8 sm:%s7]
    %9 = vrot.lane.b32.xlu0 %v8, 112
    %v10 = vpop.permute.xlu0 %9
    %vm11 = vcmask 1048448
    %12 = vst.msk [vmem:[#allocation0] ss:$8 sm:$0x3] %vm11, %v10
    %s13 = scalar_lea.vmem %s0, 6
    %s14 = smov 3
    %v15 = vld [vmem:[%s13] ss:$8 sm:%s14]
    %16 = vrot.lane.b32.xlu0 %v15, 96
    %v17 = vpop.permute.xlu0 %16
    %vm18 = vcmask 917248
    %19 = vst.msk [vmem:[#allocation0] ss:$8 sm:$0x3] %vm18, %v17
    %s20 = scalar_lea.vmem %s0, 5
    %s21 = smov 3
    %v22 = vld [vmem:[%s20] ss:$8 sm:%s21]
    %23 = vrot.lane.b32.xlu0 %v22, 80
    %v24 = vpop.permute.xlu0 %23
    %vm25 = vcmask 786048
    %26 = vst.msk [vmem:[#allocation0] ss:$8 sm:$0x3] %vm25, %v24
    %s27 = scalar_lea.vmem %s0, 4
    %s28 = smov 3
    %v29 = vld [vmem:[%s27] ss:$8 sm:%s28]
    %30 = vrot.lane.b32.xlu0 %v29, 64
    %v31 = vpop.permute.xlu0 %30
    %vm32 = vcmask 654848
    %33 = vst.msk [vmem:[#allocation0] ss:$8 sm:$0x3] %vm32, %v31
    %s34 = scalar_lea.vmem %s0, 3
    %s35 = smov 3
    %v36 = vld [vmem:[%s34] ss:$8 sm:%s35]
    %37 = vrot.lane.b32.xlu0 %v36, 48
    %v38 = vpop.permute.xlu0 %37
    %vm39 = vcmask 523648
    %40 = vst.msk [vmem:[#allocation0] ss:$8 sm:$0x3] %vm39, %v38
    %s41 = scalar_lea.vmem %s0, 2
    %s42 = smov 3
    %v43 = vld [vmem:[%s41] ss:$8 sm:%s42]
    %44 = vrot.lane.b32.xlu0 %v43, 32
    %v45 = vpop.permute.xlu0 %44
    %vm46 = vcmask 392448
    %47 = vst.msk [vmem:[#allocation0] ss:$8 sm:$0x3] %vm46, %v45
    %s48 = scalar_lea.vmem %s0, 1
    %s49 = smov 3
    %v50 = vld [vmem:[%s48] ss:$8 sm:%s49]
    %51 = vrot.lane.b32.xlu0 %v50, 16
    %v52 = vpop.permute.xlu0 %51
    %vm53 = vcmask 261248
    %54 = vst.msk [vmem:[#allocation0] ss:$8 sm:$0x3] %vm53, %v52
    %s56 = sshllo.u32 0, 1
    %v58 = vld [vmem:[#allocation0] sm:%s56]
    %s59 = sshllo.u32 0, 1
    %60 = vst [vmem:[%s1] sm:%s59] %v58
    %s61 = scalar_lea.vmem [#allocation0], 8
    %v62 = vld [vmem:[%s61] sm:%s56]
    %s63 = sshllo.u32 0, 1
    %s64 = scalar_lea.vmem %s1, 1
    %65 = vst [vmem:[%s64] sm:%s63] %v62

// kernel: cbl_forward.3
$region0: #{cbl_forward.3}
  #allocation0 [shape = 'u32[]', space=smem, size = 0x4, offset = 0x4, fixed_abs, tag = 'smem constant byte address 0x4 - core index']
  #allocation1 [shape = 'u32[144,128]{1,0:T(1,128)}', space=vmem, size = 0x12000, scoped, tag = 'internal scratch']
  %s0 = inlined_call_operand.vmem [shape: f32[32,256], index: 0, kind: input, shape index: {}]
  %s1 = inlined_call_operand.vmem [shape: f32[1,256], index: 1, kind: input, shape index: {}]
  %s2 = inlined_call_operand.vmem [shape: f32[1,256], index: 2, kind: input, shape index: {}]
  %s3 = inlined_call_operand.vmem [shape: f32[32,256], index: 3, kind: output, shape index: {}]
  %s4 = sld [smem:[#allocation0]]
  $region45: #{cbl_forward.3} parent=0
    _
  %s6 = ssub.s32 1, %s4
  %s7 = scalar_select 0, %s6, %s4
  loop: start=0, step=1, limit=4
  $region2: #{cbl_forward.3} parent=0 // loop_pre_header
    _
  $region3: #{cbl_forward.3} parent=0 // loop_header
    %s9 = sphi 0, %s13
    %p10 = scmp.ge.s32.totalorder %s9, 4
    %s19 = sphi 0, %s21
    %s22 = sphi 0, %s19
    %s23 = sphi 0, %s22
    %s39 = sphi 0, %s23
    %s43 = sphi 0, %s43
    %s45 = sphi 0, %s43
    %s46 = sphi 0, %s45
    %s60 = sphi 0, %s46
    %s64 = sphi 0, %s64
    %s66 = sphi 0, %s64
    %s67 = sphi 0, %s66
    %s81 = sphi 0, %s67
    %s87 = sphi 0, %s89
    %s90 = sphi 0, %s87
    %s91 = sphi 0, %s90
    %s107 = sphi 0, %s91
  $region4: #{cbl_forward.3} parent=0 // loop_header_branch
    %12 = sbr.rel (%p10) target = $region8
  $region5: #{cbl_forward.3} parent=0 // loop_body
    %s14 = ssub.s32 %s9, 1
    %s15 = ssub.s32 %s9, 2
    %s16 = sadd.s32 %s9, 1
    %s17 = ssub.s32 %s9, %s16
    %p18 = scmp.eq.s32.totalorder %s17, 0
    %s20 = sadd.s32 %s19, 1
    %s21 = scalar_select %p18, %s19, %s20
    %p24 = pneg %p18
    %p25 = scmp.eq.s32.totalorder %s9, 1
    %p26 = por %p24, %p25
    %p27 = scmp.ne.s32.totalorder %s19, %s22
    %p28 = scmp.eq.s32.totalorder %s9, 0
    %p29 = por %p27, %p28
    %p30 = scmp.ne.s32.totalorder %s19, %s22
    %p31 = scmp.eq.s32.totalorder %s14, 1
    %p32 = por %p30, %p31
    %p33 = scmp.ne.s32.totalorder %s22, %s23
    %p34 = scmp.eq.s32.totalorder %s14, 0
    %p35 = por %p33, %p34
    %p36 = scmp.ne.s32.totalorder %s22, %s23
    %p37 = scmp.eq.s32.totalorder %s15, 1
    %p38 = por %p36, %p37
    %p40 = scmp.ne.s32.totalorder %s23, %s39
    %p41 = scmp.eq.s32.totalorder %s15, 0
    %p42 = por %p40, %p41
    %s44 = sadd.s32 %s43, 1
    %p47 = scmp.eq.s32.totalorder %s9, 1
    %p48 = scmp.ne.s32.totalorder %s43, %s45
    %p49 = scmp.eq.s32.totalorder %s9, 0
    %p50 = por %p48, %p49
    %p51 = scmp.ne.s32.totalorder %s43, %s45
    %p52 = scmp.eq.s32.totalorder %s14, 1
    %p53 = por %p51, %p52
    %p54 = scmp.ne.s32.totalorder %s45, %s46
    %p55 = scmp.eq.s32.totalorder %s14, 0
    %p56 = por %p54, %p55
    %p57 = scmp.ne.s32.totalorder %s45, %s46
    %p58 = scmp.eq.s32.totalorder %s15, 1
    %p59 = por %p57, %p58
    %p61 = scmp.ne.s32.totalorder %s46, %s60
    %p62 = scmp.eq.s32.totalorder %s15, 0
    %p63 = por %p61, %p62
    %s65 = sadd.s32 %s64, 1
    %p68 = scmp.eq.s32.totalorder %s9, 1
    %p69 = scmp.ne.s32.totalorder %s64, %s66
    %p70 = scmp.eq.s32.totalorder %s9, 0
    %p71 = por %p69, %p70
    %p72 = scmp.ne.s32.totalorder %s64, %s66
    %p73 = scmp.eq.s32.totalorder %s14, 1
    %p74 = por %p72, %p73
    %p75 = scmp.ne.s32.totalorder %s66, %s67
    %p76 = scmp.eq.s32.totalorder %s14, 0
    %p77 = por %p75, %p76
    %p78 = scmp.ne.s32.totalorder %s66, %s67
    %p79 = scmp.eq.s32.totalorder %s15, 1
    %p80 = por %p78, %p79
    %p82 = scmp.ne.s32.totalorder %s67, %s81
    %p83 = scmp.eq.s32.totalorder %s15, 0
    %p84 = por %p82, %p83
    %s85 = ssub.s32 %s9, %s16
    %p86 = scmp.eq.s32.totalorder %s85, 0
    %s88 = sadd.s32 %s87, 1
    %s89 = scalar_select %p86, %s87, %s88
    %p92 = pneg %p86
    %p93 = scmp.eq.s32.totalorder %s9, 1
    %p94 = por %p92, %p93
    %p95 = scmp.ne.s32.totalorder %s87, %s90
    %p96 = scmp.eq.s32.totalorder %s9, 0
    %p97 = por %p95, %p96
    %p98 = scmp.ne.s32.totalorder %s87, %s90
    %p99 = scmp.eq.s32.totalorder %s14, 1
    %p100 = por %p98, %p99
    %p101 = scmp.ne.s32.totalorder %s90, %s91
    %p102 = scmp.eq.s32.totalorder %s14, 0
    %p103 = por %p101, %p102
    %p104 = scmp.ne.s32.totalorder %s90, %s91
    %p105 = scmp.eq.s32.totalorder %s15, 1
    %p106 = por %p104, %p105
    %p108 = scmp.ne.s32.totalorder %s91, %s107
    %p109 = scmp.eq.s32.totalorder %s15, 0
    %p110 = por %p108, %p109
    %p111 = scmp.le.s32.totalorder 1, %s9
    %p112 = scmp.lt.s32.totalorder %s9, 3
    %p113 = pnand %p111, %p112
    %p114 = pneg %p113
    // Predicated region
    $region9: #{cbl_forward.3} parent=5 // pred_check
      _
    $region10: #{cbl_forward.3} parent=5 // pred_check_branch
      %116 = sbr.rel (%p113) target = $region12
    $region11: #{cbl_forward.3} parent=5 // pred_region
      %s117 = ssub.s32 %s9, 1
      // Predicated region
      $region13: #{cbl_forward.3} parent=11 // pred_check
        %p118 = pneg %p56
      $region14: #{cbl_forward.3} parent=11 // pred_check_branch
        %120 = sbr.rel (%p118) target = $region16
      $region15: #{cbl_forward.3} parent=11 // pred_region
        _
      $region16: #{cbl_forward.3} parent=11 // pred_fallthru
        _
      // Predicated region
      $region17: #{cbl_forward.3} parent=11 // pred_check
        %p121 = pneg %p77
      $region18: #{cbl_forward.3} parent=11 // pred_check_branch
        %123 = sbr.rel (%p121) target = $region20
      $region19: #{cbl_forward.3} parent=11 // pred_region
        _
      $region20: #{cbl_forward.3} parent=11 // pred_fallthru
        _
    $region12: #{cbl_forward.3} parent=5 // pred_fallthru
      _
    %p124 = scmp.lt.s32.totalorder %s9, 2
    // Predicated region
    $region21: #{cbl_forward.3} parent=5 // pred_check
      %p125 = pneg %p124
    $region22: #{cbl_forward.3} parent=5 // pred_check_branch
      %127 = sbr.rel (%p125) target = $region24
    $region23: #{cbl_forward.3} parent=5 // pred_region
      // Predicated region
      $region25: #{cbl_forward.3} parent=23 // pred_check
        %p128 = pneg %p29
      $region26: #{cbl_forward.3} parent=23 // pred_check_branch
        %130 = sbr.rel (%p128) target = $region28
      $region27: #{cbl_forward.3} parent=23 // pred_region
        %s131 = smul.u32 2, %s9
        %p132 = scmp.lt.s32.totalorder %s131, 3
        %s133 = scalar_select %p132, %s131, 3
        %s134 = smul.addr %s133, 2
        %s135 = smul.addr %s134, 8
        %s136 = scalar_lea.vmem %s0, %s135
        %s137 = smul.u32 2, %s9
      $region28: #{cbl_forward.3} parent=23 // pred_fallthru
        _
    $region24: #{cbl_forward.3} parent=5 // pred_fallthru
      _
    %p138 = scmp.le.s32.totalorder 1, %s9
    %p139 = scmp.lt.s32.totalorder %s9, 3
    %p140 = pnand %p138, %p139
    %p141 = pneg %p140
    // Predicated region
    $region29: #{cbl_forward.3} parent=5 // pred_check
      _
    $region30: #{cbl_forward.3} parent=5 // pred_check_branch
      %143 = sbr.rel (%p140) target = $region32
    $region31: #{cbl_forward.3} parent=5 // pred_region
      %s144 = ssub.s32 %s9, 1
      %s145 = smul.u32 2, %s14
      %p146 = scmp.lt.s32.totalorder %s145, 3
      %s147 = scalar_select %p146, %s145, 3
      %s148 = smul.addr %s147, 2
      %s149 = smul.addr %s148, 8
      %s150 = scalar_lea.vmem %s0, %s149
      %p151 = pneg %p35
      %p152 = pneg %p32
      %p153 = pneg %p56
      %p154 = pneg %p53
      %p155 = pneg %p77
      %p156 = pneg %p74
      %p157 = pneg %p103
      %p158 = pneg %p100
      %s159 = smul.u32 2, %s14
      %p160 = scmp.lt.s32.totalorder %s159, 3
      %s161 = scalar_select %p160, %s159, 3
      %s162 = smul.addr %s161, 2
      %s163 = smul.addr %s162, 8
      %s164 = scalar_lea.vmem %s3, %s163
      %s165 = smul.u32 2, %s14
      %p166 = scmp.lt.s32.totalorder %s165, 3
      %s167 = scalar_select %p166, %s165, 3
      %s168 = smul.addr %s167, 2
      %s169 = smul.addr %s168, 8
      %s170 = scalar_lea.vmem %s0, %s169
      %s171 = smul.u32 2, %s14
      %s172 = smul.u32 2, %s14
      %p173 = scmp.lt.s32.totalorder %s172, 3
      %s174 = scalar_select %p173, %s172, 3
      %s175 = smul.addr %s174, 2
      %s176 = smul.addr %s175, 8
      %s177 = scalar_lea.vmem %s3, %s176
      %s178 = smul.u32 2, %s14
      %v179 = vld [vmem:[%s170] sm:$0xff]
      %v180 = vld [vmem:[%s170 + $0x8] sm:$0xff]
      %v181 = vld [vmem:[%s170 + $0x10] sm:$0xff]
      %v182 = vld [vmem:[%s170 + $0x18] sm:$0xff]
      %v183 = vld [vmem:[%s1] sm:$0x3]
      %v185 = vlaneseq
      %v186 = vshrl.u32 %v185, 7
      %v187 = vsub.s32 0, %v186
      %v188 = vrot.slane %v183, %v187
      %v189 = vlaneseq
      %v190 = vshrl.u32 %v189, 7
      %v191 = vsub.s32 1, %v190
      %v192 = vrot.slane %v183, %v191
      %v195 = vmul.f32 %v179, %v188
      %v196 = vmul.f32 %v180, %v192
      %v197 = vmul.f32 %v181, %v188
      %v198 = vmul.f32 %v182, %v192
      %v199 = vld [vmem:[%s2] sm:$0x3]
      %v201 = vlaneseq
      %v202 = vshrl.u32 %v201, 7
      %v203 = vsub.s32 0, %v202
      %v204 = vrot.slane %v199, %v203
      %v205 = vlaneseq
      %v206 = vshrl.u32 %v205, 7
      %v207 = vsub.s32 1, %v206
      %v208 = vrot.slane %v199, %v207
      %v211 = vadd.f32 %v195, %v204
      %v212 = vadd.f32 %v196, %v208
      %v213 = vadd.f32 %v197, %v204
      %v214 = vadd.f32 %v198, %v208
      %vm215 = vcmp.ge.f32.partialorder %v211, 0.0
      %vm216 = vcmp.ge.f32.partialorder %v212, 0.0
      %vm217 = vcmp.ge.f32.partialorder %v213, 0.0
      %vm218 = vcmp.ge.f32.partialorder %v214, 0.0
      %v219 = vmul.f32 %v211, 0.01
      %v220 = vmul.f32 %v212, 0.01
      %v221 = vmul.f32 %v213, 0.01
      %v222 = vmul.f32 %v214, 0.01
      %v223 = vsel %vm215, %v211, %v219
      %v224 = vsel %vm216, %v212, %v220
      %v225 = vsel %vm217, %v213, %v221
      %v226 = vsel %vm218, %v214, %v222
      %227 = vst [vmem:[%s177] sm:$0xff] %v223
      %228 = vst [vmem:[%s177 + $0x8] sm:$0xff] %v224
      %229 = vst [vmem:[%s177 + $0x10] sm:$0xff] %v225
      %230 = vst [vmem:[%s177 + $0x18] sm:$0xff] %v226
      %s231 = smul.u32 2, %s14
      %p232 = scmp.lt.s32.totalorder %s231, 3
      %s233 = scalar_select %p232, %s231, 3
      %s234 = smul.addr %s233, 2
      %s235 = smul.addr %s234, 8
      %s236 = scalar_lea.vmem %s3, %s235
      // Predicated region
      $region33: #{cbl_forward.3} parent=31 // pred_check
        %p237 = pneg %p100
      $region34: #{cbl_forward.3} parent=31 // pred_check_branch
        %239 = sbr.rel (%p237) target = $region36
      $region35: #{cbl_forward.3} parent=31 // pred_region
        %s240 = smul.u32 2, %s14
      $region36: #{cbl_forward.3} parent=31 // pred_fallthru
        _
    $region32: #{cbl_forward.3} parent=5 // pred_fallthru
      _
    %p241 = scmp.le.s32.totalorder 2, %s9
    // Predicated region
    $region37: #{cbl_forward.3} parent=5 // pred_check
      %p242 = pneg %p241
    $region38: #{cbl_forward.3} parent=5 // pred_check_branch
      %244 = sbr.rel (%p242) target = $region40
    $region39: #{cbl_forward.3} parent=5 // pred_region
      %s245 = ssub.s32 %s9, 2
      // Predicated region
      $region41: #{cbl_forward.3} parent=39 // pred_check
        %p246 = pneg %p106
      $region42: #{cbl_forward.3} parent=39 // pred_check_branch
        %248 = sbr.rel (%p246) target = $region44
      $region43: #{cbl_forward.3} parent=39 // pred_region
        %s249 = smul.u32 2, %s15
        %p250 = scmp.lt.s32.totalorder %s249, 3
        %s251 = scalar_select %p250, %s249, 3
        %s252 = smul.addr %s251, 2
        %s253 = smul.addr %s252, 8
        %s254 = scalar_lea.vmem %s3, %s253
      $region44: #{cbl_forward.3} parent=39 // pred_fallthru
        _
    $region40: #{cbl_forward.3} parent=5 // pred_fallthru
      _
  $region6: #{cbl_forward.3} parent=0 // loop_footer
    %s13 = sadd.s32 1, %s9
  $region7: #{cbl_forward.3} parent=0 // loop_footer_branch
    %8 = sbr.rel target = $region3
  $region8: #{cbl_forward.3} parent=0 // loop_exit
    _

// kernel: cbl_forward.2
$region0: #{cbl_forward.2}
  #allocation0 [shape = 'u32[]', space=smem, size = 0x4, offset = 0x4, fixed_abs, tag = 'smem constant byte address 0x4 - core index']
  #allocation1 [shape = 'u32[144,128]{1,0:T(1,128)}', space=vmem, size = 0x12000, scoped, tag = 'internal scratch']
  #allocation2 [shape = 'f32[16,16,72]{2,1,0:T(8,128)}', space=vmem, size = 0x20000, scoped, tag = 'scratch operand']
  %s0 = inlined_call_operand.vmem [shape: f32[2,18,18,8], index: 0, kind: input, shape index: {}]
  %s1 = inlined_call_operand.vmem [shape: f32[72,16], index: 1, kind: input, shape index: {}]
  %s2 = inlined_call_operand.vmem [shape: f32[512,16], index: 2, kind: output, shape index: {0}]
  %s3 = inlined_call_operand.vmem [shape: f32[2,1,16], index: 3, kind: output, shape index: {1}]
  %s4 = inlined_call_operand.vmem [shape: f32[2,1,16], index: 4, kind: output, shape index: {2}]
  %5 = xla_tuple %s2, %s3, %s4
  %s6 = sld [smem:[#allocation0]]
  $region61: #{cbl_forward.2} parent=0
    _
  %s8 = ssub.s32 1, %s6
  %s9 = scalar_select 0, %s8, %s6
  loop: start=0, step=1, limit=4
  $region2: #{cbl_forward.2} parent=0 // loop_pre_header
    _
  $region3: #{cbl_forward.2} parent=0 // loop_header
    %s11 = sphi 0, %s15
    %p12 = scmp.ge.s32.totalorder %s11, 4
    %s18 = sphi 0, %s30
    %s19 = sphi 0, %s26
    %s20 = sphi 0, %s18
    %s21 = sphi 0, %s19
    %s22 = sphi 0, %s20
    %s23 = sphi 0, %s21
    %s33 = sphi 0, %s35
    %s36 = sphi 0, %s33
    %s37 = sphi 0, %s36
    %s53 = sphi 0, %s37
    %s57 = sphi 0, %s57
    %s59 = sphi 0, %s57
    %s60 = sphi 0, %s59
    %s74 = sphi 0, %s60
    %s82 = sphi 0, %s84
    %s85 = sphi 0, %s82
    %s86 = sphi 0, %s85
    %s102 = sphi 0, %s86
    %s108 = sphi 0, %s110
    %s111 = sphi 0, %s108
    %s112 = sphi 0, %s111
    %s128 = sphi 0, %s112
    %s134 = sphi 0, %s136
    %s137 = sphi 0, %s134
    %s138 = sphi 0, %s137
    %s154 = sphi 0, %s138
  $region4: #{cbl_forward.2} parent=0 // loop_header_branch
    %14 = sbr.rel (%p12) target = $region8
  $region5: #{cbl_forward.2} parent=0 // loop_body
    %s16 = ssub.s32 %s11, 1
    %s17 = ssub.s32 %s11, 2
    %s24 = sadd.s32 1, %s19
    %p25 = scmp.ge.s32.totalorder %s24, 1
    %s26 = scalar_select %p25, 0, %s24
    %s27 = sadd.s32 1, %s18
    %s28 = scalar_select %p25, %s27, %s18
    %p29 = scmp.ge.s32.totalorder %s28, 2
    %s30 = scalar_select %p29, 0, %s28
    %s31 = ssub.s32 %s18, %s30
    %p32 = scmp.eq.s32.totalorder %s31, 0
    %s34 = sadd.s32 %s33, 1
    %s35 = scalar_select %p32, %s33, %s34
    %p38 = pneg %p32
    %p39 = scmp.eq.s32.totalorder %s11, 1
    %p40 = por %p38, %p39
    %p41 = scmp.ne.s32.totalorder %s33, %s36
    %p42 = scmp.eq.s32.totalorder %s11, 0
    %p43 = por %p41, %p42
    %p44 = scmp.ne.s32.totalorder %s33, %s36
    %p45 = scmp.eq.s32.totalorder %s16, 1
    %p46 = por %p44, %p45
    %p47 = scmp.ne.s32.totalorder %s36, %s37
    %p48 = scmp.eq.s32.totalorder %s16, 0
    %p49 = por %p47, %p48
    %p50 = scmp.ne.s32.totalorder %s36, %s37
    %p51 = scmp.eq.s32.totalorder %s17, 1
    %p52 = por %p50, %p51
    %p54 = scmp.ne.s32.totalorder %s37, %s53
    %p55 = scmp.eq.s32.totalorder %s17, 0
    %p56 = por %p54, %p55
    %s58 = sadd.s32 %s57, 1
    %p61 = scmp.eq.s32.totalorder %s11, 1
    %p62 = scmp.ne.s32.totalorder %s57, %s59
    %p63 = scmp.eq.s32.totalorder %s11, 0
    %p64 = por %p62, %p63
    %p65 = scmp.ne.s32.totalorder %s57, %s59
    %p66 = scmp.eq.s32.totalorder %s16, 1
    %p67 = por %p65, %p66
    %p68 = scmp.ne.s32.totalorder %s59, %s60
    %p69 = scmp.eq.s32.totalorder %s16, 0
    %p70 = por %p68, %p69
    %p71 = scmp.ne.s32.totalorder %s59, %s60
    %p72 = scmp.eq.s32.totalorder %s17, 1
    %p73 = por %p71, %p72
    %p75 = scmp.ne.s32.totalorder %s60, %s74
    %p76 = scmp.eq.s32.totalorder %s17, 0
    %p77 = por %p75, %p76
    %s78 = sadd.s32 %s18, %s19
    %s79 = sadd.s32 %s30, %s26
    %s80 = ssub.s32 %s78, %s79
    %p81 = scmp.eq.s32.totalorder %s80, 0
    %s83 = sadd.s32 %s82, 1
    %s84 = scalar_select %p81, %s82, %s83
    %p87 = pneg %p81
    %p88 = scmp.eq.s32.totalorder %s11, 1
    %p89 = por %p87, %p88
    %p90 = scmp.ne.s32.totalorder %s82, %s85
    %p91 = scmp.eq.s32.totalorder %s11, 0
    %p92 = por %p90, %p91
    %p93 = scmp.ne.s32.totalorder %s82, %s85
    %p94 = scmp.eq.s32.totalorder %s16, 1
    %p95 = por %p93, %p94
    %p96 = scmp.ne.s32.totalorder %s85, %s86
    %p97 = scmp.eq.s32.totalorder %s16, 0
    %p98 = por %p96, %p97
    %p99 = scmp.ne.s32.totalorder %s85, %s86
    %p100 = scmp.eq.s32.totalorder %s17, 1
    %p101 = por %p99, %p100
    %p103 = scmp.ne.s32.totalorder %s86, %s102
    %p104 = scmp.eq.s32.totalorder %s17, 0
    %p105 = por %p103, %p104
    %s106 = ssub.s32 %s18, %s30
    %p107 = scmp.eq.s32.totalorder %s106, 0
    %s109 = sadd.s32 %s108, 1
    %s110 = scalar_select %p107, %s108, %s109
    %p113 = pneg %p107
    %p114 = scmp.eq.s32.totalorder %s11, 1
    %p115 = por %p113, %p114
    %p116 = scmp.ne.s32.totalorder %s108, %s111
    %p117 = scmp.eq.s32.totalorder %s11, 0
    %p118 = por %p116, %p117
    %p119 = scmp.ne.s32.totalorder %s108, %s111
    %p120 = scmp.eq.s32.totalorder %s16, 1
    %p121 = por %p119, %p120
    %p122 = scmp.ne.s32.totalorder %s111, %s112
    %p123 = scmp.eq.s32.totalorder %s16, 0
    %p124 = por %p122, %p123
    %p125 = scmp.ne.s32.totalorder %s111, %s112
    %p126 = scmp.eq.s32.totalorder %s17, 1
    %p127 = por %p125, %p126
    %p129 = scmp.ne.s32.totalorder %s112, %s128
    %p130 = scmp.eq.s32.totalorder %s17, 0
    %p131 = por %p129, %p130
    %s132 = ssub.s32 %s18, %s30
    %p133 = scmp.eq.s32.totalorder %s132, 0
    %s135 = sadd.s32 %s134, 1
    %s136 = scalar_select %p133, %s134, %s135
    %p139 = pneg %p133
    %p140 = scmp.eq.s32.totalorder %s11, 1
    %p141 = por %p139, %p140
    %p142 = scmp.ne.s32.totalorder %s134, %s137
    %p143 = scmp.eq.s32.totalorder %s11, 0
    %p144 = por %p142, %p143
    %p145 = scmp.ne.s32.totalorder %s134, %s137
    %p146 = scmp.eq.s32.totalorder %s16, 1
    %p147 = por %p145, %p146
    %p148 = scmp.ne.s32.totalorder %s137, %s138
    %p149 = scmp.eq.s32.totalorder %s16, 0
    %p150 = por %p148, %p149
    %p151 = scmp.ne.s32.totalorder %s137, %s138
    %p152 = scmp.eq.s32.totalorder %s17, 1
    %p153 = por %p151, %p152
    %p155 = scmp.ne.s32.totalorder %s138, %s154
    %p156 = scmp.eq.s32.totalorder %s17, 0
    %p157 = por %p155, %p156
    %p158 = scmp.le.s32.totalorder 1, %s11
    %p159 = scmp.lt.s32.totalorder %s11, 3
    %p160 = pnand %p158, %p159
    %p161 = pneg %p160
    // Predicated region
    $region9: #{cbl_forward.2} parent=5 // pred_check
      _
    $region10: #{cbl_forward.2} parent=5 // pred_check_branch
      %163 = sbr.rel (%p160) target = $region12
    $region11: #{cbl_forward.2} parent=5 // pred_region
      %s164 = ssub.s32 %s11, 1
      // Predicated region
      $region13: #{cbl_forward.2} parent=11 // pred_check
        %p165 = pneg %p70
      $region14: #{cbl_forward.2} parent=11 // pred_check_branch
        %167 = sbr.rel (%p165) target = $region16
      $region15: #{cbl_forward.2} parent=11 // pred_region
        _
      $region16: #{cbl_forward.2} parent=11 // pred_fallthru
        _
    $region12: #{cbl_forward.2} parent=5 // pred_fallthru
      _
    %p168 = scmp.lt.s32.totalorder %s11, 2
    // Predicated region
    $region17: #{cbl_forward.2} parent=5 // pred_check
      %p169 = pneg %p168
    $region18: #{cbl_forward.2} parent=5 // pred_check_branch
      %171 = sbr.rel (%p169) target = $region20
    $region19: #{cbl_forward.2} parent=5 // pred_region
      // Predicated region
      $region21: #{cbl_forward.2} parent=19 // pred_check
        %p172 = pneg %p43
      $region22: #{cbl_forward.2} parent=19 // pred_check_branch
        %174 = sbr.rel (%p172) target = $region24
      $region23: #{cbl_forward.2} parent=19 // pred_region
        %p175 = scmp.lt.s32.totalorder %s18, 1
        %s176 = scalar_select %p175, %s18, 1
        %s177 = smul.addr %s176, 54
        %s178 = smul.addr %s177, 8
        %s179 = scalar_lea.vmem %s0, %s178
      $region24: #{cbl_forward.2} parent=19 // pred_fallthru
        _
    $region20: #{cbl_forward.2} parent=5 // pred_fallthru
      _
    %p180 = scmp.le.s32.totalorder 1, %s11
    %p181 = scmp.lt.s32.totalorder %s11, 3
    %p182 = pnand %p180, %p181
    %p183 = pneg %p182
    // Predicated region
    $region25: #{cbl_forward.2} parent=5 // pred_check
      _
    $region26: #{cbl_forward.2} parent=5 // pred_check_branch
      %185 = sbr.rel (%p182) target = $region28
    $region27: #{cbl_forward.2} parent=5 // pred_region
      %s186 = ssub.s32 %s11, 1
      %p187 = scmp.lt.s32.totalorder %s20, 1
      %s188 = scalar_select %p187, %s20, 1
      %s189 = smul.addr %s188, 54
      %s190 = smul.addr %s189, 8
      %s191 = scalar_lea.vmem %s0, %s190
      %p192 = pneg %p49
      %p193 = pneg %p46
      %p194 = pneg %p70
      %p195 = pneg %p67
      %p196 = pneg %p98
      %p197 = pneg %p95
      %s198 = sadd.s32 %s20, %s21
      %s199 = smul.u32 32, %s198
      %p200 = scmp.lt.s32.totalorder %s199, 63
      %s201 = scalar_select %p200, %s199, 63
      %s202 = smul.addr %s201, 8
      %s203 = scalar_lea.vmem %s2, %s202
      %p204 = pneg %p124
      %p205 = pneg %p121
      %p206 = scmp.lt.s32.totalorder %s20, 1
      %s207 = scalar_select %p206, %s20, 1
      %s208 = scalar_lea.vmem %s3, %s207
      %p209 = pneg %p150
      %p210 = pneg %p147
      %p211 = scmp.lt.s32.totalorder %s20, 1
      %s212 = scalar_select %p211, %s20, 1
      %s213 = scalar_lea.vmem %s4, %s212
      %p214 = scmp.lt.s32.totalorder %s20, 1
      %s215 = scalar_select %p214, %s20, 1
      %s216 = smul.addr %s215, 54
      %s217 = smul.addr %s216, 8
      %s218 = scalar_lea.vmem %s0, %s217
      %s219 = sadd.s32 %s20, %s21
      %s220 = smul.u32 32, %s219
      %p221 = scmp.lt.s32.totalorder %s220, 63
      %s222 = scalar_select %p221, %s220, 63
      %s223 = smul.addr %s222, 8
      %s224 = scalar_lea.vmem %s2, %s223
      %s225 = sadd.s32 %s20, %s21
      %s226 = smul.u32 32, %s225
      %p227 = scmp.lt.s32.totalorder %s20, 1
      %s228 = scalar_select %p227, %s20, 1
      %s229 = scalar_lea.vmem %s3, %s228
      %p230 = scmp.lt.s32.totalorder %s20, 1
      %s231 = scalar_select %p230, %s20, 1
      %s232 = scalar_lea.vmem %s4, %s231
      %p233 = scmp.eq.s32.totalorder %s21, 0
      // Predicated region
      $region29: #{cbl_forward.2} parent=27 // pred_check
        %p234 = pneg %p233
      $region30: #{cbl_forward.2} parent=27 // pred_check_branch
        %236 = sbr.rel (%p234) target = $region32
      $region31: #{cbl_forward.2} parent=27 // pred_region
        %vm237 = vcmask 122880
        %238 = vst.msk [vmem:[%s229] sm:$0x1] %vm237, 0.0
        %239 = vst.msk [vmem:[%s232] sm:$0x1] %vm237, 0.0
      $region32: #{cbl_forward.2} parent=27 // pred_fallthru
        _
      %s240 = smul.u32 %s21, 16
      %s241 = smul.u32 %s240, 24
      %s242 = scalar_lea.vmem %s218, %s241
      %v243 = vld [vmem:[%s242] sm:$0xff]
      %v244 = vld [vmem:[%s242 + $0x8] sm:$0xff]
      %v245 = vld [vmem:[%s242 + $0x18] sm:$0xff]
      %v246 = vld [vmem:[%s242 + $0x20] sm:$0xff]
      %v247 = vld [vmem:[%s242 + $0x30] sm:$0xff]
      %v248 = vld [vmem:[%s242 + $0x38] sm:$0xff]
      %v249 = vld [vmem:[%s242 + $0x48] sm:$0xff]
      %v250 = vld [vmem:[%s242 + $0x50] sm:$0xff]
      %v251 = vld [vmem:[%s242 + $0x60] sm:$0xff]
      %v252 = vld [vmem:[%s242 + $0x68] sm:$0xff]
      %v253 = vld [vmem:[%s242 + $0x78] sm:$0xff]
      %v254 = vld [vmem:[%s242 + $0x80] sm:$0xff]
      %v255 = vld [vmem:[%s242 + $0x90] sm:$0xff]
      %v256 = vld [vmem:[%s242 + $0x98] sm:$0xff]
      %v257 = vld [vmem:[%s242 + $0xa8] sm:$0xff]
      %v258 = vld [vmem:[%s242 + $0xb0] sm:$0xff]
      %v259 = vld [vmem:[%s242 + $0xc0] sm:$0xff]
      %v260 = vld [vmem:[%s242 + $0xc8] sm:$0xff]
      %v261 = vld [vmem:[%s242 + $0xd8] sm:$0xff]
      %v262 = vld [vmem:[%s242 + $0xe0] sm:$0xff]
      %v263 = vld [vmem:[%s242 + $0xf0] sm:$0xff]
      %v264 = vld [vmem:[%s242 + $0xf8] sm:$0xff]
      %v265 = vld [vmem:[%s242 + $0x108] sm:$0xff]
      %v266 = vld [vmem:[%s242 + $0x110] sm:$0xff]
      %v267 = vld [vmem:[%s242 + $0x120] sm:$0xff]
      %v268 = vld [vmem:[%s242 + $0x128] sm:$0xff]
      %v269 = vld [vmem:[%s242 + $0x138] sm:$0xff]
      %v270 = vld [vmem:[%s242 + $0x140] sm:$0xff]
      %v271 = vld [vmem:[%s242 + $0x150] sm:$0xff]
      %v272 = vld [vmem:[%s242 + $0x158] sm:$0xff]
      %v273 = vld [vmem:[%s242 + $0x168] sm:$0xff]
      %v274 = vld [vmem:[%s242 + $0x170] sm:$0xff]
      %vm275 = vcmask 64512
      %276 = vst.msk [vmem:[#allocation2] sm:$0xff] %vm275, %v243
      %277 = vst.msk [vmem:[#allocation2 + $0x8] sm:$0xff] %vm275, %v244
      %278 = vst.msk [vmem:[#allocation2 + $0x10] sm:$0xff] %vm275, %v245
      %279 = vst.msk [vmem:[#allocation2 + $0x18] sm:$0xff] %vm275, %v246
      %280 = vst.msk [vmem:[#allocation2 + $0x20] sm:$0xff] %vm275, %v247
      %281 = vst.msk [vmem:[#allocation2 + $0x28] sm:$0xff] %vm275, %v248
      %282 = vst.msk [vmem:[#allocation2 + $0x30] sm:$0xff] %vm275, %v249
      %283 = vst.msk [vmem:[#allocation2 + $0x38] sm:$0xff] %vm275, %v250
      %284 = vst.msk [vmem:[#allocation2 + $0x40] sm:$0xff] %vm275, %v251
      %285 = vst.msk [vmem:[#allocation2 + $0x48] sm:$0xff] %vm275, %v252
      %286 = vst.msk [vmem:[#allocation2 + $0x50] sm:$0xff] %vm275, %v253
      %287 = vst.msk [vmem:[#allocation2 + $0x58] sm:$0xff] %vm275, %v254
      %288 = vst.msk [vmem:[#allocation2 + $0x60] sm:$0xff] %vm275, %v255
      %289 = vst.msk [vmem:[#allocation2 + $0x68] sm:$0xff] %vm275, %v256
      %290 = vst.msk [vmem:[#allocation2 + $0x70] sm:$0xff] %vm275, %v257
      %291 = vst.msk [vmem:[#allocation2 + $0x78] sm:$0xff] %vm275, %v258
      %292 = vst.msk [vmem:[#allocation2 + $0x80] sm:$0xff] %vm275, %v259
      %293 = vst.msk [vmem:[#allocation2 + $0x88] sm:$0xff] %vm275, %v260
      %294 = vst.msk [vmem:[#allocation2 + $0x90] sm:$0xff] %vm275, %v261
      %295 = vst.msk [vmem:[#allocation2 + $0x98] sm:$0xff] %vm275, %v262
      %296 = vst.msk [vmem:[#allocation2 + $0xa0] sm:$0xff] %vm275, %v263
      %297 = vst.msk [vmem:[#allocation2 + $0xa8] sm:$0xff] %vm275, %v264
      %298 = vst.msk [vmem:[#allocation2 + $0xb0] sm:$0xff] %vm275, %v265
      %299 = vst.msk [vmem:[#allocation2 + $0xb8] sm:$0xff] %vm275, %v266
      %300 = vst.msk [vmem:[#allocation2 + $0xc0] sm:$0xff] %vm275, %v267
      %301 = vst.msk [vmem:[#allocation2 + $0xc8] sm:$0xff] %vm275, %v268
      %302 = vst.msk [vmem:[#allocation2 + $0xd0] sm:$0xff] %vm275, %v269
      %303 = vst.msk [vmem:[#allocation2 + $0xd8] sm:$0xff] %vm275, %v270
      %304 = vst.msk [vmem:[#allocation2 + $0xe0] sm:$0xff] %vm275, %v271
      %305 = vst.msk [vmem:[#allocation2 + $0xe8] sm:$0xff] %vm275, %v272
      %306 = vst.msk [vmem:[#allocation2 + $0xf0] sm:$0xff] %vm275, %v273
      %307 = vst.msk [vmem:[#allocation2 + $0xf8] sm:$0xff] %vm275, %v274
      %v308 = vld [vmem:[%s242 + $0x1] sm:$0xff]
      %v309 = vld [vmem:[%s242 + $0x9] sm:$0xff]
      %v310 = vld [vmem:[%s242 + $0x19] sm:$0xff]
      %v311 = vld [vmem:[%s242 + $0x21] sm:$0xff]
      %v312 = vld [vmem:[%s242 + $0x31] sm:$0xff]
      %v313 = vld [vmem:[%s242 + $0x39] sm:$0xff]
      %v314 = vld [vmem:[%s242 + $0x49] sm:$0xff]
      %v315 = vld [vmem:[%s242 + $0x51] sm:$0xff]
      %v316 = vld [vmem:[%s242 + $0x61] sm:$0xff]
      %v317 = vld [vmem:[%s242 + $0x69] sm:$0xff]
      %v318 = vld [vmem:[%s242 + $0x79] sm:$0xff]
      %v319 = vld [vmem:[%s242 + $0x81] sm:$0xff]
      %v320 = vld [vmem:[%s242 + $0x91] sm:$0xff]
      %v321 = vld [vmem:[%s242 + $0x99] sm:$0xff]
      %v322 = vld [vmem:[%s242 + $0xa9] sm:$0xff]
      %v323 = vld [vmem:[%s242 + $0xb1] sm:$0xff]
      %v324 = vld [vmem:[%s242 + $0xc1] sm:$0xff]
      %v325 = vld [vmem:[%s242 + $0xc9] sm:$0xff]
      %v326 = vld [vmem:[%s242 + $0xd9] sm:$0xff]
      %v327 = vld [vmem:[%s242 + $0xe1] sm:$0xff]
      %v328 = vld [vmem:[%s242 + $0xf1] sm:$0xff]
      %v329 = vld [vmem:[%s242 + $0xf9] sm:$0xff]
      %v330 = vld [vmem:[%s242 + $0x109] sm:$0xff]
      %v331 = vld [vmem:[%s242 + $0x111] sm:$0xff]
      %v332 = vld [vmem:[%s242 + $0x121] sm:$0xff]
      %v333 = vld [vmem:[%s242 + $0x129] sm:$0xff]
      %v334 = vld [vmem:[%s242 + $0x139] sm:$0xff]
      %v335 = vld [vmem:[%s242 + $0x141] sm:$0xff]
      %v336 = vld [vmem:[%s242 + $0x151] sm:$0xff]
      %v337 = vld [vmem:[%s242 + $0x159] sm:$0xff]
      %v338 = vld [vmem:[%s242 + $0x169] sm:$0xff]
      %v339 = vld [vmem:[%s242 + $0x171] sm:$0xff]
      %372 = vrot.lane.b32.xlu0 %v308, 8
      %v373 = vpop.permute.xlu0 %372
      %374 = vrot.lane.b32.xlu0 %v309, 8
      %v375 = vpop.permute.xlu0 %374
      %376 = vrot.lane.b32.xlu0 %v310, 8
      %v377 = vpop.permute.xlu0 %376
      %378 = vrot.lane.b32.xlu0 %v311, 8
      %v379 = vpop.permute.xlu0 %378
      %380 = vrot.lane.b32.xlu0 %v312, 8
      %v381 = vpop.permute.xlu0 %380
      %382 = vrot.lane.b32.xlu0 %v313, 8
      %v383 = vpop.permute.xlu0 %382
      %384 = vrot.lane.b32.xlu0 %v314, 8
      %v385 = vpop.permute.xlu0 %384
      %386 = vrot.lane.b32.xlu0 %v315, 8
      %v387 = vpop.permute.xlu0 %386
      %388 = vrot.lane.b32.xlu0 %v316, 8
      %v389 = vpop.permute.xlu0 %388
      %390 = vrot.lane.b32.xlu0 %v317, 8
      %v391 = vpop.permute.xlu0 %390
      %392 = vrot.lane.b32.xlu0 %v318, 8
      %v393 = vpop.permute.xlu0 %392
      %394 = vrot.lane.b32.xlu0 %v319, 8
      %v395 = vpop.permute.xlu0 %394
      %396 = vrot.lane.b32.xlu0 %v320, 8
      %v397 = vpop.permute.xlu0 %396
      %398 = vrot.lane.b32.xlu0 %v321, 8
      %v399 = vpop.permute.xlu0 %398
      %400 = vrot.lane.b32.xlu0 %v322, 8
      %v401 = vpop.permute.xlu0 %400
      %402 = vrot.lane.b32.xlu0 %v323, 8
      %v403 = vpop.permute.xlu0 %402
      %404 = vrot.lane.b32.xlu0 %v324, 8
      %v405 = vpop.permute.xlu0 %404
      %406 = vrot.lane.b32.xlu0 %v325, 8
      %v407 = vpop.permute.xlu0 %406
      %408 = vrot.lane.b32.xlu0 %v326, 8
      %v409 = vpop.permute.xlu0 %408
      %410 = vrot.lane.b32.xlu0 %v327, 8
      %v411 = vpop.permute.xlu0 %410
      %412 = vrot.lane.b32.xlu0 %v328, 8
      %v413 = vpop.permute.xlu0 %412
      %414 = vrot.lane.b32.xlu0 %v329, 8
      %v415 = vpop.permute.xlu0 %414
      %416 = vrot.lane.b32.xlu0 %v330, 8
      %v417 = vpop.permute.xlu0 %416
      %418 = vrot.lane.b32.xlu0 %v331, 8
      %v419 = vpop.permute.xlu0 %418
      %420 = vrot.lane.b32.xlu0 %v332, 8
      %v421 = vpop.permute.xlu0 %420
      %422 = vrot.lane.b32.xlu0 %v333, 8
      %v423 = vpop.permute.xlu0 %422
      %424 = vrot.lane.b32.xlu0 %v334, 8
      %v425 = vpop.permute.xlu0 %424
      %426 = vrot.lane.b32.xlu0 %v335, 8
      %v427 = vpop.permute.xlu0 %426
      %428 = vrot.lane.b32.xlu0 %v336, 8
      %v429 = vpop.permute.xlu0 %428
      %430 = vrot.lane.b32.xlu0 %v337, 8
      %v431 = vpop.permute.xlu0 %430
      %432 = vrot.lane.b32.xlu0 %v338, 8
      %v433 = vpop.permute.xlu0 %432
      %434 = vrot.lane.b32.xlu0 %v339, 8
      %v435 = vpop.permute.xlu0 %434
      %vm468 = vcmask 130112
      %469 = vst.msk [vmem:[#allocation2] sm:$0xff] %vm468, %v373
      %470 = vst.msk [vmem:[#allocation2 + $0x8] sm:$0xff] %vm468, %v375
      %471 = vst.msk [vmem:[#allocation2 + $0x10] sm:$0xff] %vm468, %v377
      %472 = vst.msk [vmem:[#allocation2 + $0x18] sm:$0xff] %vm468, %v379
      %473 = vst.msk [vmem:[#allocation2 + $0x20] sm:$0xff] %vm468, %v381
      %474 = vst.msk [vmem:[#allocation2 + $0x28] sm:$0xff] %vm468, %v383
      %475 = vst.msk [vmem:[#allocation2 + $0x30] sm:$0xff] %vm468, %v385
      %476 = vst.msk [vmem:[#allocation2 + $0x38] sm:$0xff] %vm468, %v387
      %477 = vst.msk [vmem:[#allocation2 + $0x40] sm:$0xff] %vm468, %v389
      %478 = vst.msk [vmem:[#allocation2 + $0x48] sm:$0xff] %vm468, %v391
      %479 = vst.msk [vmem:[#allocation2 + $0x50] sm:$0xff] %vm468, %v393
      %480 = vst.msk [vmem:[#allocation2 + $0x58] sm:$0xff] %vm468, %v395
      %481 = vst.msk [vmem:[#allocation2 + $0x60] sm:$0xff] %vm468, %v397
      %482 = vst.msk [vmem:[#allocation2 + $0x68] sm:$0xff] %vm468, %v399
      %483 = vst.msk [vmem:[#allocation2 + $0x70] sm:$0xff] %vm468, %v401
      %484 = vst.msk [vmem:[#allocation2 + $0x78] sm:$0xff] %vm468, %v403
      %485 = vst.msk [vmem:[#allocation2 + $0x80] sm:$0xff] %vm468, %v405
      %486 = vst.msk [vmem:[#allocation2 + $0x88] sm:$0xff] %vm468, %v407
      %487 = vst.msk [vmem:[#allocation2 + $0x90] sm:$0xff] %vm468, %v409
      %488 = vst.msk [vmem:[#allocation2 + $0x98] sm:$0xff] %vm468, %v411
      %489 = vst.msk [vmem:[#allocation2 + $0xa0] sm:$0xff] %vm468, %v413
      %490 = vst.msk [vmem:[#allocation2 + $0xa8] sm:$0xff] %vm468, %v415
      %491 = vst.msk [vmem:[#allocation2 + $0xb0] sm:$0xff] %vm468, %v417
      %492 = vst.msk [vmem:[#allocation2 + $0xb8] sm:$0xff] %vm468, %v419
      %493 = vst.msk [vmem:[#allocation2 + $0xc0] sm:$0xff] %vm468, %v421
      %494 = vst.msk [vmem:[#allocation2 + $0xc8] sm:$0xff] %vm468, %v423
      %495 = vst.msk [vmem:[#allocation2 + $0xd0] sm:$0xff] %vm468, %v425
      %496 = vst.msk [vmem:[#allocation2 + $0xd8] sm:$0xff] %vm468, %v427
      %497 = vst.msk [vmem:[#allocation2 + $0xe0] sm:$0xff] %vm468, %v429
      %498 = vst.msk [vmem:[#allocation2 + $0xe8] sm:$0xff] %vm468, %v431
      %499 = vst.msk [vmem:[#allocation2 + $0xf0] sm:$0xff] %vm468, %v433
      %500 = vst.msk [vmem:[#allocation2 + $0xf8] sm:$0xff] %vm468, %v435
      %v501 = vld [vmem:[%s242 + $0x2] sm:$0xff]
      %v502 = vld [vmem:[%s242 + $0xa] sm:$0xff]
      %v503 = vld [vmem:[%s242 + $0x1a] sm:$0xff]
      %v504 = vld [vmem:[%s242 + $0x22] sm:$0xff]
      %v505 = vld [vmem:[%s242 + $0x32] sm:$0xff]
      %v506 = vld [vmem:[%s242 + $0x3a] sm:$0xff]
      %v507 = vld [vmem:[%s242 + $0x4a] sm:$0xff]
      %v508 = vld [vmem:[%s242 + $0x52] sm:$0xff]
      %v509 = vld [vmem:[%s242 + $0x62] sm:$0xff]
      %v510 = vld [vmem:[%s242 + $0x6a] sm:$0xff]
      %v511 = vld [vmem:[%s242 + $0x7a] sm:$0xff]
      %v512 = vld [vmem:[%s242 + $0x82] sm:$0xff]
      %v513 = vld [vmem:[%s242 + $0x92] sm:$0xff]
      %v514 = vld [vmem:[%s242 + $0x9a] sm:$0xff]
      %v515 = vld [vmem:[%s242 + $0xaa] sm:$0xff]
      %v516 = vld [vmem:[%s242 + $0xb2] sm:$0xff]
      %v517 = vld [vmem:[%s242 + $0xc2] sm:$0xff]
      %v518 = vld [vmem:[%s242 + $0xca] sm:$0xff]
      %v519 = vld [vmem:[%s242 + $0xda] sm:$0xff]
      %v520 = vld [vmem:[%s242 + $0xe2] sm:$0xff]
      %v521 = vld [vmem:[%s242 + $0xf2] sm:$0xff]
      %v522 = vld [vmem:[%s242 + $0xfa] sm:$0xff]
      %v523 = vld [vmem:[%s242 + $0x10a] sm:$0xff]
      %v524 = vld [vmem:[%s242 + $0x112] sm:$0xff]
      %v525 = vld [vmem:[%s242 + $0x122] sm:$0xff]
      %v526 = vld [vmem:[%s242 + $0x12a] sm:$0xff]
      %v527 = vld [vmem:[%s242 + $0x13a] sm:$0xff]
      %v528 = vld [vmem:[%s242 + $0x142] sm:$0xff]
      %v529 = vld [vmem:[%s242 + $0x152] sm:$0xff]
      %v530 = vld [vmem:[%s242 + $0x15a] sm:$0xff]
      %v531 = vld [vmem:[%s242 + $0x16a] sm:$0xff]
      %v532 = vld [vmem:[%s242 + $0x172] sm:$0xff]
      %565 = vrot.lane.b32.xlu0 %v501, 16
      %v566 = vpop.permute.xlu0 %565
      %567 = vrot.lane.b32.xlu0 %v502, 16
      %v568 = vpop.permute.xlu0 %567
      %569 = vrot.lane.b32.xlu0 %v503, 16
      %v570 = vpop.permute.xlu0 %569
      %571 = vrot.lane.b32.xlu0 %v504, 16
      %v572 = vpop.permute.xlu0 %571
      %573 = vrot.lane.b32.xlu0 %v505, 16
      %v574 = vpop.permute.xlu0 %573
      %575 = vrot.lane.b32.xlu0 %v506, 16
      %v576 = vpop.permute.xlu0 %575
      %577 = vrot.lane.b32.xlu0 %v507, 16
      %v578 = vpop.permute.xlu0 %577
      %579 = vrot.lane.b32.xlu0 %v508, 16
      %v580 = vpop.permute.xlu0 %579
      %581 = vrot.lane.b32.xlu0 %v509, 16
      %v582 = vpop.permute.xlu0 %581
      %583 = vrot.lane.b32.xlu0 %v510, 16
      %v584 = vpop.permute.xlu0 %583
      %585 = vrot.lane.b32.xlu0 %v511, 16
      %v586 = vpop.permute.xlu0 %585
      %587 = vrot.lane.b32.xlu0 %v512, 16
      %v588 = vpop.permute.xlu0 %587
      %589 = vrot.lane.b32.xlu0 %v513, 16
      %v590 = vpop.permute.xlu0 %589
      %591 = vrot.lane.b32.xlu0 %v514, 16
      %v592 = vpop.permute.xlu0 %591
      %593 = vrot.lane.b32.xlu0 %v515, 16
      %v594 = vpop.permute.xlu0 %593
      %595 = vrot.lane.b32.xlu0 %v516, 16
      %v596 = vpop.permute.xlu0 %595
      %597 = vrot.lane.b32.xlu0 %v517, 16
      %v598 = vpop.permute.xlu0 %597
      %599 = vrot.lane.b32.xlu0 %v518, 16
      %v600 = vpop.permute.xlu0 %599
      %601 = vrot.lane.b32.xlu0 %v519, 16
      %v602 = vpop.permute.xlu0 %601
      %603 = vrot.lane.b32.xlu0 %v520, 16
      %v604 = vpop.permute.xlu0 %603
      %605 = vrot.lane.b32.xlu0 %v521, 16
      %v606 = vpop.permute.xlu0 %605
      %607 = vrot.lane.b32.xlu0 %v522, 16
      %v608 = vpop.permute.xlu0 %607
      %609 = vrot.lane.b32.xlu0 %v523, 16
      %v610 = vpop.permute.xlu0 %609
      %611 = vrot.lane.b32.xlu0 %v524, 16
      %v612 = vpop.permute.xlu0 %611
      %613 = vrot.lane.b32.xlu0 %v525, 16
      %v614 = vpop.permute.xlu0 %613
      %615 = vrot.lane.b32.xlu0 %v526, 16
      %v616 = vpop.permute.xlu0 %615
      %617 = vrot.lane.b32.xlu0 %v527, 16
      %v618 = vpop.permute.xlu0 %617
      %619 = vrot.lane.b32.xlu0 %v528, 16
      %v620 = vpop.permute.xlu0 %619
      %621 = vrot.lane.b32.xlu0 %v529, 16
      %v622 = vpop.permute.xlu0 %621
      %623 = vrot.lane.b32.xlu0 %v530, 16
      %v624 = vpop.permute.xlu0 %623
      %625 = vrot.lane.b32.xlu0 %v531, 16
      %v626 = vpop.permute.xlu0 %625
      %627 = vrot.lane.b32.xlu0 %v532, 16
      %v628 = vpop.permute.xlu0 %627
      %vm661 = vcmask 195712
      %662 = vst.msk [vmem:[#allocation2] sm:$0xff] %vm661, %v566
      %663 = vst.msk [vmem:[#allocation2 + $0x8] sm:$0xff] %vm661, %v568
      %664 = vst.msk [vmem:[#allocation2 + $0x10] sm:$0xff] %vm661, %v570
      %665 = vst.msk [vmem:[#allocation2 + $0x18] sm:$0xff] %vm661, %v572
      %666 = vst.msk [vmem:[#allocation2 + $0x20] sm:$0xff] %vm661, %v574
      %667 = vst.msk [vmem:[#allocation2 + $0x28] sm:$0xff] %vm661, %v576
      %668 = vst.msk [vmem:[#allocation2 + $0x30] sm:$0xff] %vm661, %v578
      %669 = vst.msk [vmem:[#allocation2 + $0x38] sm:$0xff] %vm661, %v580
      %670 = vst.msk [vmem:[#allocation2 + $0x40] sm:$0xff] %vm661, %v582
      %671 = vst.msk [vmem:[#allocation2 + $0x48] sm:$0xff] %vm661, %v584
      %672 = vst.msk [vmem:[#allocation2 + $0x50] sm:$0xff] %vm661, %v586
      %673 = vst.msk [vmem:[#allocation2 + $0x58] sm:$0xff] %vm661, %v588
      %674 = vst.msk [vmem:[#allocation2 + $0x60] sm:$0xff] %vm661, %v590
      %675 = vst.msk [vmem:[#allocation2 + $0x68] sm:$0xff] %vm661, %v592
      %676 = vst.msk [vmem:[#allocation2 + $0x70] sm:$0xff] %vm661, %v594
      %677 = vst.msk [vmem:[#allocation2 + $0x78] sm:$0xff] %vm661, %v596
      %678 = vst.msk [vmem:[#allocation2 + $0x80] sm:$0xff] %vm661, %v598
      %679 = vst.msk [vmem:[#allocation2 + $0x88] sm:$0xff] %vm661, %v600
      %680 = vst.msk [vmem:[#allocation2 + $0x90] sm:$0xff] %vm661, %v602
      %681 = vst.msk [vmem:[#allocation2 + $0x98] sm:$0xff] %vm661, %v604
      %682 = vst.msk [vmem:[#allocation2 + $0xa0] sm:$0xff] %vm661, %v606
      %683 = vst.msk [vmem:[#allocation2 + $0xa8] sm:$0xff] %vm661, %v608
      %684 = vst.msk [vmem:[#allocation2 + $0xb0] sm:$0xff] %vm661, %v610
      %685 = vst.msk [vmem:[#allocation2 + $0xb8] sm:$0xff] %vm661, %v612
      %686 = vst.msk [vmem:[#allocation2 + $0xc0] sm:$0xff] %vm661, %v614
      %687 = vst.msk [vmem:[#allocation2 + $0xc8] sm:$0xff] %vm661, %v616
      %688 = vst.msk [vmem:[#allocation2 + $0xd0] sm:$0xff] %vm661, %v618
      %689 = vst.msk [vmem:[#allocation2 + $0xd8] sm:$0xff] %vm661, %v620
      %690 = vst.msk [vmem:[#allocation2 + $0xe0] sm:$0xff] %vm661, %v622
      %691 = vst.msk [vmem:[#allocation2 + $0xe8] sm:$0xff] %vm661, %v624
      %692 = vst.msk [vmem:[#allocation2 + $0xf0] sm:$0xff] %vm661, %v626
      %693 = vst.msk [vmem:[#allocation2 + $0xf8] sm:$0xff] %vm661, %v628
      %s694 = sadd.s32 %s240, 1
      %s695 = smul.u32 %s694, 24
      %s696 = scalar_lea.vmem %s218, %s695
      %v697 = vld [vmem:[%s696] sm:$0xff]
      %v698 = vld [vmem:[%s696 + $0x8] sm:$0xff]
      %v699 = vld [vmem:[%s696 + $0x18] sm:$0xff]
      %v700 = vld [vmem:[%s696 + $0x20] sm:$0xff]
      %v701 = vld [vmem:[%s696 + $0x30] sm:$0xff]
      %v702 = vld [vmem:[%s696 + $0x38] sm:$0xff]
      %v703 = vld [vmem:[%s696 + $0x48] sm:$0xff]
      %v704 = vld [vmem:[%s696 + $0x50] sm:$0xff]
      %v705 = vld [vmem:[%s696 + $0x60] sm:$0xff]
      %v706 = vld [vmem:[%s696 + $0x68] sm:$0xff]
      %v707 = vld [vmem:[%s696 + $0x78] sm:$0xff]
      %v708 = vld [vmem:[%s696 + $0x80] sm:$0xff]
      %v709 = vld [vmem:[%s696 + $0x90] sm:$0xff]
      %v710 = vld [vmem:[%s696 + $0x98] sm:$0xff]
      %v711 = vld [vmem:[%s696 + $0xa8] sm:$0xff]
      %v712 = vld [vmem:[%s696 + $0xb0] sm:$0xff]
      %v713 = vld [vmem:[%s696 + $0xc0] sm:$0xff]
      %v714 = vld [vmem:[%s696 + $0xc8] sm:$0xff]
      %v715 = vld [vmem:[%s696 + $0xd8] sm:$0xff]
      %v716 = vld [vmem:[%s696 + $0xe0] sm:$0xff]
      %v717 = vld [vmem:[%s696 + $0xf0] sm:$0xff]
      %v718 = vld [vmem:[%s696 + $0xf8] sm:$0xff]
      %v719 = vld [vmem:[%s696 + $0x108] sm:$0xff]
      %v720 = vld [vmem:[%s696 + $0x110] sm:$0xff]
      %v721 = vld [vmem:[%s696 + $0x120] sm:$0xff]
      %v722 = vld [vmem:[%s696 + $0x128] sm:$0xff]
      %v723 = vld [vmem:[%s696 + $0x138] sm:$0xff]
      %v724 = vld [vmem:[%s696 + $0x140] sm:$0xff]
      %v725 = vld [vmem:[%s696 + $0x150] sm:$0xff]
      %v726 = vld [vmem:[%s696 + $0x158] sm:$0xff]
      %v727 = vld [vmem:[%s696 + $0x168] sm:$0xff]
      %v728 = vld [vmem:[%s696 + $0x170] sm:$0xff]
      %761 = vrot.lane.b32.xlu0 %v697, 24
      %v762 = vpop.permute.xlu0 %761
      %763 = vrot.lane.b32.xlu0 %v698, 24
      %v764 = vpop.permute.xlu0 %763
      %765 = vrot.lane.b32.xlu0 %v699, 24
      %v766 = vpop.permute.xlu0 %765
      %767 = vrot.lane.b32.xlu0 %v700, 24
      %v768 = vpop.permute.xlu0 %767
      %769 = vrot.lane.b32.xlu0 %v701, 24
      %v770 = vpop.permute.xlu0 %769
      %771 = vrot.lane.b32.xlu0 %v702, 24
      %v772 = vpop.permute.xlu0 %771
      %773 = vrot.lane.b32.xlu0 %v703, 24
      %v774 = vpop.permute.xlu0 %773
      %775 = vrot.lane.b32.xlu0 %v704, 24
      %v776 = vpop.permute.xlu0 %775
      %777 = vrot.lane.b32.xlu0 %v705, 24
      %v778 = vpop.permute.xlu0 %777
      %779 = vrot.lane.b32.xlu0 %v706, 24
      %v780 = vpop.permute.xlu0 %779
      %781 = vrot.lane.b32.xlu0 %v707, 24
      %v782 = vpop.permute.xlu0 %781
      %783 = vrot.lane.b32.xlu0 %v708, 24
      %v784 = vpop.permute.xlu0 %783
      %785 = vrot.lane.b32.xlu0 %v709, 24
      %v786 = vpop.permute.xlu0 %785
      %787 = vrot.lane.b32.xlu0 %v710, 24
      %v788 = vpop.permute.xlu0 %787
      %789 = vrot.lane.b32.xlu0 %v711, 24
      %v790 = vpop.permute.xlu0 %789
      %791 = vrot.lane.b32.xlu0 %v712, 24
      %v792 = vpop.permute.xlu0 %791
      %793 = vrot.lane.b32.xlu0 %v713, 24
      %v794 = vpop.permute.xlu0 %793
      %795 = vrot.lane.b32.xlu0 %v714, 24
      %v796 = vpop.permute.xlu0 %795
      %797 = vrot.lane.b32.xlu0 %v715, 24
      %v798 = vpop.permute.xlu0 %797
      %799 = vrot.lane.b32.xlu0 %v716, 24
      %v800 = vpop.permute.xlu0 %799
      %801 = vrot.lane.b32.xlu0 %v717, 24
      %v802 = vpop.permute.xlu0 %801
      %803 = vrot.lane.b32.xlu0 %v718, 24
      %v804 = vpop.permute.xlu0 %803
      %805 = vrot.lane.b32.xlu0 %v719, 24
      %v806 = vpop.permute.xlu0 %805
      %807 = vrot.lane.b32.xlu0 %v720, 24
      %v808 = vpop.permute.xlu0 %807
      %809 = vrot.lane.b32.xlu0 %v721, 24
      %v810 = vpop.permute.xlu0 %809
      %811 = vrot.lane.b32.xlu0 %v722, 24
      %v812 = vpop.permute.xlu0 %811
      %813 = vrot.lane.b32.xlu0 %v723, 24
      %v814 = vpop.permute.xlu0 %813
      %815 = vrot.lane.b32.xlu0 %v724, 24
      %v816 = vpop.permute.xlu0 %815
      %817 = vrot.lane.b32.xlu0 %v725, 24
      %v818 = vpop.permute.xlu0 %817
      %819 = vrot.lane.b32.xlu0 %v726, 24
      %v820 = vpop.permute.xlu0 %819
      %821 = vrot.lane.b32.xlu0 %v727, 24
      %v822 = vpop.permute.xlu0 %821
      %823 = vrot.lane.b32.xlu0 %v728, 24
      %v824 = vpop.permute.xlu0 %823
      %vm857 = vcmask 261312
      %858 = vst.msk [vmem:[#allocation2] sm:$0xff] %vm857, %v762
      %859 = vst.msk [vmem:[#allocation2 + $0x8] sm:$0xff] %vm857, %v764
      %860 = vst.msk [vmem:[#allocation2 + $0x10] sm:$0xff] %vm857, %v766
      %861 = vst.msk [vmem:[#allocation2 + $0x18] sm:$0xff] %vm857, %v768
      %862 = vst.msk [vmem:[#allocation2 + $0x20] sm:$0xff] %vm857, %v770
      %863 = vst.msk [vmem:[#allocation2 + $0x28] sm:$0xff] %vm857, %v772
      %864 = vst.msk [vmem:[#allocation2 + $0x30] sm:$0xff] %vm857, %v774
      %865 = vst.msk [vmem:[#allocation2 + $0x38] sm:$0xff] %vm857, %v776
      %866 = vst.msk [vmem:[#allocation2 + $0x40] sm:$0xff] %vm857, %v778
      %867 = vst.msk [vmem:[#allocation2 + $0x48] sm:$0xff] %vm857, %v780
      %868 = vst.msk [vmem:[#allocation2 + $0x50] sm:$0xff] %vm857, %v782
      %869 = vst.msk [vmem:[#allocation2 + $0x58] sm:$0xff] %vm857, %v784
      %870 = vst.msk [vmem:[#allocation2 + $0x60] sm:$0xff] %vm857, %v786
      %871 = vst.msk [vmem:[#allocation2 + $0x68] sm:$0xff] %vm857, %v788
      %872 = vst.msk [vmem:[#allocation2 + $0x70] sm:$0xff] %vm857, %v790
      %873 = vst.msk [vmem:[#allocation2 + $0x78] sm:$0xff] %vm857, %v792
      %874 = vst.msk [vmem:[#allocation2 + $0x80] sm:$0xff] %vm857, %v794
      %875 = vst.msk [vmem:[#allocation2 + $0x88] sm:$0xff] %vm857, %v796
      %876 = vst.msk [vmem:[#allocation2 + $0x90] sm:$0xff] %vm857, %v798
      %877 = vst.msk [vmem:[#allocation2 + $0x98] sm:$0xff] %vm857, %v800
      %878 = vst.msk [vmem:[#allocation2 + $0xa0] sm:$0xff] %vm857, %v802
      %879 = vst.msk [vmem:[#allocation2 + $0xa8] sm:$0xff] %vm857, %v804
      %880 = vst.msk [vmem:[#allocation2 + $0xb0] sm:$0xff] %vm857, %v806
      %881 = vst.msk [vmem:[#allocation2 + $0xb8] sm:$0xff] %vm857, %v808
      %882 = vst.msk [vmem:[#allocation2 + $0xc0] sm:$0xff] %vm857, %v810
      %883 = vst.msk [vmem:[#allocation2 + $0xc8] sm:$0xff] %vm857, %v812
      %884 = vst.msk [vmem:[#allocation2 + $0xd0] sm:$0xff] %vm857, %v814
      %885 = vst.msk [vmem:[#allocation2 + $0xd8] sm:$0xff] %vm857, %v816
      %886 = vst.msk [vmem:[#allocation2 + $0xe0] sm:$0xff] %vm857, %v818
      %887 = vst.msk [vmem:[#allocation2 + $0xe8] sm:$0xff] %vm857, %v820
      %888 = vst.msk [vmem:[#allocation2 + $0xf0] sm:$0xff] %vm857, %v822
      %889 = vst.msk [vmem:[#allocation2 + $0xf8] sm:$0xff] %vm857, %v824
      %v890 = vld [vmem:[%s696 + $0x1] sm:$0xff]
      %v891 = vld [vmem:[%s696 + $0x9] sm:$0xff]
      %v892 = vld [vmem:[%s696 + $0x19] sm:$0xff]
      %v893 = vld [vmem:[%s696 + $0x21] sm:$0xff]
      %v894 = vld [vmem:[%s696 + $0x31] sm:$0xff]
      %v895 = vld [vmem:[%s696 + $0x39] sm:$0xff]
      %v896 = vld [vmem:[%s696 + $0x49] sm:$0xff]
      %v897 = vld [vmem:[%s696 + $0x51] sm:$0xff]
      %v898 = vld [vmem:[%s696 + $0x61] sm:$0xff]
      %v899 = vld [vmem:[%s696 + $0x69] sm:$0xff]
      %v900 = vld [vmem:[%s696 + $0x79] sm:$0xff]
      %v901 = vld [vmem:[%s696 + $0x81] sm:$0xff]
      %v902 = vld [vmem:[%s696 + $0x91] sm:$0xff]
      %v903 = vld [vmem:[%s696 + $0x99] sm:$0xff]
      %v904 = vld [vmem:[%s696 + $0xa9] sm:$0xff]
      %v905 = vld [vmem:[%s696 + $0xb1] sm:$0xff]
      %v906 = vld [vmem:[%s696 + $0xc1] sm:$0xff]
      %v907 = vld [vmem:[%s696 + $0xc9] sm:$0xff]
      %v908 = vld [vmem:[%s696 + $0xd9] sm:$0xff]
      %v909 = vld [vmem:[%s696 + $0xe1] sm:$0xff]
      %v910 = vld [vmem:[%s696 + $0xf1] sm:$0xff]
      %v911 = vld [vmem:[%s696 + $0xf9] sm:$0xff]
      %v912 = vld [vmem:[%s696 + $0x109] sm:$0xff]
      %v913 = vld [vmem:[%s696 + $0x111] sm:$0xff]
      %v914 = vld [vmem:[%s696 + $0x121] sm:$0xff]
      %v915 = vld [vmem:[%s696 + $0x129] sm:$0xff]
      %v916 = vld [vmem:[%s696 + $0x139] sm:$0xff]
      %v917 = vld [vmem:[%s696 + $0x141] sm:$0xff]
      %v918 = vld [vmem:[%s696 + $0x151] sm:$0xff]
      %v919 = vld [vmem:[%s696 + $0x159] sm:$0xff]
      %v920 = vld [vmem:[%s696 + $0x169] sm:$0xff]
      %v921 = vld [vmem:[%s696 + $0x171] sm:$0xff]
      %954 = vrot.lane.b32.xlu0 %v890, 32
      %v955 = vpop.permute.xlu0 %954
      %956 = vrot.lane.b32.xlu0 %v891, 32
      %v957 = vpop.permute.xlu0 %956
      %958 = vrot.lane.b32.xlu0 %v892, 32
      %v959 = vpop.permute.xlu0 %958
      %960 = vrot.lane.b32.xlu0 %v893, 32
      %v961 = vpop.permute.xlu0 %960
      %962 = vrot.lane.b32.xlu0 %v894, 32
      %v963 = vpop.permute.xlu0 %962
      %964 = vrot.lane.b32.xlu0 %v895, 32
      %v965 = vpop.permute.xlu0 %964
      %966 = vrot.lane.b32.xlu0 %v896, 32
      %v967 = vpop.permute.xlu0 %966
      %968 = vrot.lane.b32.xlu0 %v897, 32
      %v969 = vpop.permute.xlu0 %968
      %970 = vrot.lane.b32.xlu0 %v898, 32
      %v971 = vpop.permute.xlu0 %970
      %972 = vrot.lane.b32.xlu0 %v899, 32
      %v973 = vpop.permute.xlu0 %972
      %974 = vrot.lane.b32.xlu0 %v900, 32
      %v975 = vpop.permute.xlu0 %974
      %976 = vrot.lane.b32.xlu0 %v901, 32
      %v977 = vpop.permute.xlu0 %976
      %978 = vrot.lane.b32.xlu0 %v902, 32
      %v979 = vpop.permute.xlu0 %978
      %980 = vrot.lane.b32.xlu0 %v903, 32
      %v981 = vpop.permute.xlu0 %980
      %982 = vrot.lane.b32.xlu0 %v904, 32
      %v983 = vpop.permute.xlu0 %982
      %984 = vrot.lane.b32.xlu0 %v905, 32
      %v985 = vpop.permute.xlu0 %984
      %986 = vrot.lane.b32.xlu0 %v906, 32
      %v987 = vpop.permute.xlu0 %986
      %988 = vrot.lane.b32.xlu0 %v907, 32
      %v989 = vpop.permute.xlu0 %988
      %990 = vrot.lane.b32.xlu0 %v908, 32
      %v991 = vpop.permute.xlu0 %990
      %992 = vrot.lane.b32.xlu0 %v909, 32
      %v993 = vpop.permute.xlu0 %992
      %994 = vrot.lane.b32.xlu0 %v910, 32
      %v995 = vpop.permute.xlu0 %994
      %996 = vrot.lane.b32.xlu0 %v911, 32
      %v997 = vpop.permute.xlu0 %996
      %998 = vrot.lane.b32.xlu0 %v912, 32
      %v999 = vpop.permute.xlu0 %998
      %1000 = vrot.lane.b32.xlu0 %v913, 32
      %v1001 = vpop.permute.xlu0 %1000
      %1002 = vrot.lane.b32.xlu0 %v914, 32
      %v1003 = vpop.permute.xlu0 %1002
      %1004 = vrot.lane.b32.xlu0 %v915, 32
      %v1005 = vpop.permute.xlu0 %1004
      %1006 = vrot.lane.b32.xlu0 %v916, 32
      %v1007 = vpop.permute.xlu0 %1006
      %1008 = vrot.lane.b32.xlu0 %v917, 32
      %v1009 = vpop.permute.xlu0 %1008
      %1010 = vrot.lane.b32.xlu0 %v918, 32
      %v1011 = vpop.permute.xlu0 %1010
      %1012 = vrot.lane.b32.xlu0 %v919, 32
      %v1013 = vpop.permute.xlu0 %1012
      %1014 = vrot.lane.b32.xlu0 %v920, 32
      %v1015 = vpop.permute.xlu0 %1014
      %1016 = vrot.lane.b32.xlu0 %v921, 32
      %v1017 = vpop.permute.xlu0 %1016
      %vm1050 = vcmask 326912
      %1051 = vst.msk [vmem:[#allocation2] sm:$0xff] %vm1050, %v955
      %1052 = vst.msk [vmem:[#allocation2 + $0x8] sm:$0xff] %vm1050, %v957
      %1053 = vst.msk [vmem:[#allocation2 + $0x10] sm:$0xff] %vm1050, %v959
      %1054 = vst.msk [vmem:[#allocation2 + $0x18] sm:$0xff] %vm1050, %v961
      %1055 = vst.msk [vmem:[#allocation2 + $0x20] sm:$0xff] %vm1050, %v963
      %1056 = vst.msk [vmem:[#allocation2 + $0x28] sm:$0xff] %vm1050, %v965
      %1057 = vst.msk [vmem:[#allocation2 + $0x30] sm:$0xff] %vm1050, %v967
      %1058 = vst.msk [vmem:[#allocation2 + $0x38] sm:$0xff] %vm1050, %v969
      %1059 = vst.msk [vmem:[#allocation2 + $0x40] sm:$0xff] %vm1050, %v971
      %1060 = vst.msk [vmem:[#allocation2 + $0x48] sm:$0xff] %vm1050, %v973
      %1061 = vst.msk [vmem:[#allocation2 + $0x50] sm:$0xff] %vm1050, %v975
      %1062 = vst.msk [vmem:[#allocation2 + $0x58] sm:$0xff] %vm1050, %v977
      %1063 = vst.msk [vmem:[#allocation2 + $0x60] sm:$0xff] %vm1050, %v979
      %1064 = vst.msk [vmem:[#allocation2 + $0x68] sm:$0xff] %vm1050, %v981
      %1065 = vst.msk [vmem:[#allocation2 + $0x70] sm:$0xff] %vm1050, %v983
      %1066 = vst.msk [vmem:[#allocation2 + $0x78] sm:$0xff] %vm1050, %v985
      %1067 = vst.msk [vmem:[#allocation2 + $0x80] sm:$0xff] %vm1050, %v987
      %1068 = vst.msk [vmem:[#allocation2 + $0x88] sm:$0xff] %vm1050, %v989
      %1069 = vst.msk [vmem:[#allocation2 + $0x90] sm:$0xff] %vm1050, %v991
      %1070 = vst.msk [vmem:[#allocation2 + $0x98] sm:$0xff] %vm1050, %v993
      %1071 = vst.msk [vmem:[#allocation2 + $0xa0] sm:$0xff] %vm1050, %v995
      %1072 = vst.msk [vmem:[#allocation2 + $0xa8] sm:$0xff] %vm1050, %v997
      %1073 = vst.msk [vmem:[#allocation2 + $0xb0] sm:$0xff] %vm1050, %v999
      %1074 = vst.msk [vmem:[#allocation2 + $0xb8] sm:$0xff] %vm1050, %v1001
      %1075 = vst.msk [vmem:[#allocation2 + $0xc0] sm:$0xff] %vm1050, %v1003
      %1076 = vst.msk [vmem:[#allocation2 + $0xc8] sm:$0xff] %vm1050, %v1005
      %1077 = vst.msk [vmem:[#allocation2 + $0xd0] sm:$0xff] %vm1050, %v1007
      %1078 = vst.msk [vmem:[#allocation2 + $0xd8] sm:$0xff] %vm1050, %v1009
      %1079 = vst.msk [vmem:[#allocation2 + $0xe0] sm:$0xff] %vm1050, %v1011
      %1080 = vst.msk [vmem:[#allocation2 + $0xe8] sm:$0xff] %vm1050, %v1013
      %1081 = vst.msk [vmem:[#allocation2 + $0xf0] sm:$0xff] %vm1050, %v1015
      %1082 = vst.msk [vmem:[#allocation2 + $0xf8] sm:$0xff] %vm1050, %v1017
      %v1083 = vld [vmem:[%s696 + $0x2] sm:$0xff]
      %v1084 = vld [vmem:[%s696 + $0xa] sm:$0xff]
      %v1085 = vld [vmem:[%s696 + $0x1a] sm:$0xff]
      %v1086 = vld [vmem:[%s696 + $0x22] sm:$0xff]
      %v1087 = vld [vmem:[%s696 + $0x32] sm:$0xff]
      %v1088 = vld [vmem:[%s696 + $0x3a] sm:$0xff]
      %v1089 = vld [vmem:[%s696 + $0x4a] sm:$0xff]
      %v1090 = vld [vmem:[%s696 + $0x52] sm:$0xff]
      %v1091 = vld [vmem:[%s696 + $0x62] sm:$0xff]
      %v1092 = vld [vmem:[%s696 + $0x6a] sm:$0xff]
      %v1093 = vld [vmem:[%s696 + $0x7a] sm:$0xff]
      %v1094 = vld [vmem:[%s696 + $0x82] sm:$0xff]
      %v1095 = vld [vmem:[%s696 + $0x92] sm:$0xff]
      %v1096 = vld [vmem:[%s696 + $0x9a] sm:$0xff]
      %v1097 = vld [vmem:[%s696 + $0xaa] sm:$0xff]
      %v1098 = vld [vmem:[%s696 + $0xb2] sm:$0xff]
      %v1099 = vld [vmem:[%s696 + $0xc2] sm:$0xff]
      %v1100 = vld [vmem:[%s696 + $0xca] sm:$0xff]
      %v1101 = vld [vmem:[%s696 + $0xda] sm:$0xff]
      %v1102 = vld [vmem:[%s696 + $0xe2] sm:$0xff]
      %v1103 = vld [vmem:[%s696 + $0xf2] sm:$0xff]
      %v1104 = vld [vmem:[%s696 + $0xfa] sm:$0xff]
      %v1105 = vld [vmem:[%s696 + $0x10a] sm:$0xff]
      %v1106 = vld [vmem:[%s696 + $0x112] sm:$0xff]
      %v1107 = vld [vmem:[%s696 + $0x122] sm:$0xff]
      %v1108 = vld [vmem:[%s696 + $0x12a] sm:$0xff]
      %v1109 = vld [vmem:[%s696 + $0x13a] sm:$0xff]
      %v1110 = vld [vmem:[%s696 + $0x142] sm:$0xff]
      %v1111 = vld [vmem:[%s696 + $0x152] sm:$0xff]
      %v1112 = vld [vmem:[%s696 + $0x15a] sm:$0xff]
      %v1113 = vld [vmem:[%s696 + $0x16a] sm:$0xff]
      %v1114 = vld [vmem:[%s696 + $0x172] sm:$0xff]
      %1147 = vrot.lane.b32.xlu0 %v1083, 40
      %v1148 = vpop.permute.xlu0 %1147
      %1149 = vrot.lane.b32.xlu0 %v1084, 40
      %v1150 = vpop.permute.xlu0 %1149
      %1151 = vrot.lane.b32.xlu0 %v1085, 40
      %v1152 = vpop.permute.xlu0 %1151
      %1153 = vrot.lane.b32.xlu0 %v1086, 40
      %v1154 = vpop.permute.xlu0 %1153
      %1155 = vrot.lane.b32.xlu0 %v1087, 40
      %v1156 = vpop.permute.xlu0 %1155
      %1157 = vrot.lane.b32.xlu0 %v1088, 40
      %v1158 = vpop.permute.xlu0 %1157
      %1159 = vrot.lane.b32.xlu0 %v1089, 40
      %v1160 = vpop.permute.xlu0 %1159
      %1161 = vrot.lane.b32.xlu0 %v1090, 40
      %v1162 = vpop.permute.xlu0 %1161
      %1163 = vrot.lane.b32.xlu0 %v1091, 40
      %v1164 = vpop.permute.xlu0 %1163
      %1165 = vrot.lane.b32.xlu0 %v1092, 40
      %v1166 = vpop.permute.xlu0 %1165
      %1167 = vrot.lane.b32.xlu0 %v1093, 40
      %v1168 = vpop.permute.xlu0 %1167
      %1169 = vrot.lane.b32.xlu0 %v1094, 40
      %v1170 = vpop.permute.xlu0 %1169
      %1171 = vrot.lane.b32.xlu0 %v1095, 40
      %v1172 = vpop.permute.xlu0 %1171
      %1173 = vrot.lane.b32.xlu0 %v1096, 40
      %v1174 = vpop.permute.xlu0 %1173
      %1175 = vrot.lane.b32.xlu0 %v1097, 40
      %v1176 = vpop.permute.xlu0 %1175
      %1177 = vrot.lane.b32.xlu0 %v1098, 40
      %v1178 = vpop.permute.xlu0 %1177
      %1179 = vrot.lane.b32.xlu0 %v1099, 40
      %v1180 = vpop.permute.xlu0 %1179
      %1181 = vrot.lane.b32.xlu0 %v1100, 40
      %v1182 = vpop.permute.xlu0 %1181
      %1183 = vrot.lane.b32.xlu0 %v1101, 40
      %v1184 = vpop.permute.xlu0 %1183
      %1185 = vrot.lane.b32.xlu0 %v1102, 40
      %v1186 = vpop.permute.xlu0 %1185
      %1187 = vrot.lane.b32.xlu0 %v1103, 40
      %v1188 = vpop.permute.xlu0 %1187
      %1189 = vrot.lane.b32.xlu0 %v1104, 40
      %v1190 = vpop.permute.xlu0 %1189
      %1191 = vrot.lane.b32.xlu0 %v1105, 40
      %v1192 = vpop.permute.xlu0 %1191
      %1193 = vrot.lane.b32.xlu0 %v1106, 40
      %v1194 = vpop.permute.xlu0 %1193
      %1195 = vrot.lane.b32.xlu0 %v1107, 40
      %v1196 = vpop.permute.xlu0 %1195
      %1197 = vrot.lane.b32.xlu0 %v1108, 40
      %v1198 = vpop.permute.xlu0 %1197
      %1199 = vrot.lane.b32.xlu0 %v1109, 40
      %v1200 = vpop.permute.xlu0 %1199
      %1201 = vrot.lane.b32.xlu0 %v1110, 40
      %v1202 = vpop.permute.xlu0 %1201
      %1203 = vrot.lane.b32.xlu0 %v1111, 40
      %v1204 = vpop.permute.xlu0 %1203
      %1205 = vrot.lane.b32.xlu0 %v1112, 40
      %v1206 = vpop.permute.xlu0 %1205
      %1207 = vrot.lane.b32.xlu0 %v1113, 40
      %v1208 = vpop.permute.xlu0 %1207
      %1209 = vrot.lane.b32.xlu0 %v1114, 40
      %v1210 = vpop.permute.xlu0 %1209
      %vm1243 = vcmask 392512
      %1244 = vst.msk [vmem:[#allocation2] sm:$0xff] %vm1243, %v1148
      %1245 = vst.msk [vmem:[#allocation2 + $0x8] sm:$0xff] %vm1243, %v1150
      %1246 = vst.msk [vmem:[#allocation2 + $0x10] sm:$0xff] %vm1243, %v1152
      %1247 = vst.msk [vmem:[#allocation2 + $0x18] sm:$0xff] %vm1243, %v1154
      %1248 = vst.msk [vmem:[#allocation2 + $0x20] sm:$0xff] %vm1243, %v1156
      %1249 = vst.msk [vmem:[#allocation2 + $0x28] sm:$0xff] %vm1243, %v1158
      %1250 = vst.msk [vmem:[#allocation2 + $0x30] sm:$0xff] %vm1243, %v1160
      %1251 = vst.msk [vmem:[#allocation2 + $0x38] sm:$0xff] %vm1243, %v1162
      %1252 = vst.msk [vmem:[#allocation2 + $0x40] sm:$0xff] %vm1243, %v1164
      %1253 = vst.msk [vmem:[#allocation2 + $0x48] sm:$0xff] %vm1243, %v1166
      %1254 = vst.msk [vmem:[#allocation2 + $0x50] sm:$0xff] %vm1243, %v1168
      %1255 = vst.msk [vmem:[#allocation2 + $0x58] sm:$0xff] %vm1243, %v1170
      %1256 = vst.msk [vmem:[#allocation2 + $0x60] sm:$0xff] %vm1243, %v1172
      %1257 = vst.msk [vmem:[#allocation2 + $0x68] sm:$0xff] %vm1243, %v1174
      %1258 = vst.msk [vmem:[#allocation2 + $0x70] sm:$0xff] %vm1243, %v1176
      %1259 = vst.msk [vmem:[#allocation2 + $0x78] sm:$0xff] %vm1243, %v1178
      %1260 = vst.msk [vmem:[#allocation2 + $0x80] sm:$0xff] %vm1243, %v1180
      %1261 = vst.msk [vmem:[#allocation2 + $0x88] sm:$0xff] %vm1243, %v1182
      %1262 = vst.msk [vmem:[#allocation2 + $0x90] sm:$0xff] %vm1243, %v1184
      %1263 = vst.msk [vmem:[#allocation2 + $0x98] sm:$0xff] %vm1243, %v1186
      %1264 = vst.msk [vmem:[#allocation2 + $0xa0] sm:$0xff] %vm1243, %v1188
      %1265 = vst.msk [vmem:[#allocation2 + $0xa8] sm:$0xff] %vm1243, %v1190
      %1266 = vst.msk [vmem:[#allocation2 + $0xb0] sm:$0xff] %vm1243, %v1192
      %1267 = vst.msk [vmem:[#allocation2 + $0xb8] sm:$0xff] %vm1243, %v1194
      %1268 = vst.msk [vmem:[#allocation2 + $0xc0] sm:$0xff] %vm1243, %v1196
      %1269 = vst.msk [vmem:[#allocation2 + $0xc8] sm:$0xff] %vm1243, %v1198
      %1270 = vst.msk [vmem:[#allocation2 + $0xd0] sm:$0xff] %vm1243, %v1200
      %1271 = vst.msk [vmem:[#allocation2 + $0xd8] sm:$0xff] %vm1243, %v1202
      %1272 = vst.msk [vmem:[#allocation2 + $0xe0] sm:$0xff] %vm1243, %v1204
      %1273 = vst.msk [vmem:[#allocation2 + $0xe8] sm:$0xff] %vm1243, %v1206
      %1274 = vst.msk [vmem:[#allocation2 + $0xf0] sm:$0xff] %vm1243, %v1208
      %1275 = vst.msk [vmem:[#allocation2 + $0xf8] sm:$0xff] %vm1243, %v1210
      %s1276 = sadd.s32 %s240, 2
      %s1277 = smul.u32 %s1276, 24
      %s1278 = scalar_lea.vmem %s218, %s1277
      %v1279 = vld [vmem:[%s1278] sm:$0xff]
      %v1280 = vld [vmem:[%s1278 + $0x8] sm:$0xff]
      %v1281 = vld [vmem:[%s1278 + $0x18] sm:$0xff]
      %v1282 = vld [vmem:[%s1278 + $0x20] sm:$0xff]
      %v1283 = vld [vmem:[%s1278 + $0x30] sm:$0xff]
      %v1284 = vld [vmem:[%s1278 + $0x38] sm:$0xff]
      %v1285 = vld [vmem:[%s1278 + $0x48] sm:$0xff]
      %v1286 = vld [vmem:[%s1278 + $0x50] sm:$0xff]
      %v1287 = vld [vmem:[%s1278 + $0x60] sm:$0xff]
      %v1288 = vld [vmem:[%s1278 + $0x68] sm:$0xff]
      %v1289 = vld [vmem:[%s1278 + $0x78] sm:$0xff]
      %v1290 = vld [vmem:[%s1278 + $0x80] sm:$0xff]
      %v1291 = vld [vmem:[%s1278 + $0x90] sm:$0xff]
      %v1292 = vld [vmem:[%s1278 + $0x98] sm:$0xff]
      %v1293 = vld [vmem:[%s1278 + $0xa8] sm:$0xff]
      %v1294 = vld [vmem:[%s1278 + $0xb0] sm:$0xff]
      %v1295 = vld [vmem:[%s1278 + $0xc0] sm:$0xff]
      %v1296 = vld [vmem:[%s1278 + $0xc8] sm:$0xff]
      %v1297 = vld [vmem:[%s1278 + $0xd8] sm:$0xff]
      %v1298 = vld [vmem:[%s1278 + $0xe0] sm:$0xff]
      %v1299 = vld [vmem:[%s1278 + $0xf0] sm:$0xff]
      %v1300 = vld [vmem:[%s1278 + $0xf8] sm:$0xff]
      %v1301 = vld [vmem:[%s1278 + $0x108] sm:$0xff]
      %v1302 = vld [vmem:[%s1278 + $0x110] sm:$0xff]
      %v1303 = vld [vmem:[%s1278 + $0x120] sm:$0xff]
      %v1304 = vld [vmem:[%s1278 + $0x128] sm:$0xff]
      %v1305 = vld [vmem:[%s1278 + $0x138] sm:$0xff]
      %v1306 = vld [vmem:[%s1278 + $0x140] sm:$0xff]
      %v1307 = vld [vmem:[%s1278 + $0x150] sm:$0xff]
      %v1308 = vld [vmem:[%s1278 + $0x158] sm:$0xff]
      %v1309 = vld [vmem:[%s1278 + $0x168] sm:$0xff]
      %v1310 = vld [vmem:[%s1278 + $0x170] sm:$0xff]
      %1343 = vrot.lane.b32.xlu0 %v1279, 48
      %v1344 = vpop.permute.xlu0 %1343
      %1345 = vrot.lane.b32.xlu0 %v1280, 48
      %v1346 = vpop.permute.xlu0 %1345
      %1347 = vrot.lane.b32.xlu0 %v1281, 48
      %v1348 = vpop.permute.xlu0 %1347
      %1349 = vrot.lane.b32.xlu0 %v1282, 48
      %v1350 = vpop.permute.xlu0 %1349
      %1351 = vrot.lane.b32.xlu0 %v1283, 48
      %v1352 = vpop.permute.xlu0 %1351
      %1353 = vrot.lane.b32.xlu0 %v1284, 48
      %v1354 = vpop.permute.xlu0 %1353
      %1355 = vrot.lane.b32.xlu0 %v1285, 48
      %v1356 = vpop.permute.xlu0 %1355
      %1357 = vrot.lane.b32.xlu0 %v1286, 48
      %v1358 = vpop.permute.xlu0 %1357
      %1359 = vrot.lane.b32.xlu0 %v1287, 48
      %v1360 = vpop.permute.xlu0 %1359
      %1361 = vrot.lane.b32.xlu0 %v1288, 48
      %v1362 = vpop.permute.xlu0 %1361
      %1363 = vrot.lane.b32.xlu0 %v1289, 48
      %v1364 = vpop.permute.xlu0 %1363
      %1365 = vrot.lane.b32.xlu0 %v1290, 48
      %v1366 = vpop.permute.xlu0 %1365
      %1367 = vrot.lane.b32.xlu0 %v1291, 48
      %v1368 = vpop.permute.xlu0 %1367
      %1369 = vrot.lane.b32.xlu0 %v1292, 48
      %v1370 = vpop.permute.xlu0 %1369
      %1371 = vrot.lane.b32.xlu0 %v1293, 48
      %v1372 = vpop.permute.xlu0 %1371
      %1373 = vrot.lane.b32.xlu0 %v1294, 48
      %v1374 = vpop.permute.xlu0 %1373
      %1375 = vrot.lane.b32.xlu0 %v1295, 48
      %v1376 = vpop.permute.xlu0 %1375
      %1377 = vrot.lane.b32.xlu0 %v1296, 48
      %v1378 = vpop.permute.xlu0 %1377
      %1379 = vrot.lane.b32.xlu0 %v1297, 48
      %v1380 = vpop.permute.xlu0 %1379
      %1381 = vrot.lane.b32.xlu0 %v1298, 48
      %v1382 = vpop.permute.xlu0 %1381
      %1383 = vrot.lane.b32.xlu0 %v1299, 48
      %v1384 = vpop.permute.xlu0 %1383
      %1385 = vrot.lane.b32.xlu0 %v1300, 48
      %v1386 = vpop.permute.xlu0 %1385
      %1387 = vrot.lane.b32.xlu0 %v1301, 48
      %v1388 = vpop.permute.xlu0 %1387
      %1389 = vrot.lane.b32.xlu0 %v1302, 48
      %v1390 = vpop.permute.xlu0 %1389
      %1391 = vrot.lane.b32.xlu0 %v1303, 48
      %v1392 = vpop.permute.xlu0 %1391
      %1393 = vrot.lane.b32.xlu0 %v1304, 48
      %v1394 = vpop.permute.xlu0 %1393
      %1395 = vrot.lane.b32.xlu0 %v1305, 48
      %v1396 = vpop.permute.xlu0 %1395
      %1397 = vrot.lane.b32.xlu0 %v1306, 48
      %v1398 = vpop.permute.xlu0 %1397
      %1399 = vrot.lane.b32.xlu0 %v1307, 48
      %v1400 = vpop.permute.xlu0 %1399
      %1401 = vrot.lane.b32.xlu0 %v1308, 48
      %v1402 = vpop.permute.xlu0 %1401
      %1403 = vrot.lane.b32.xlu0 %v1309, 48
      %v1404 = vpop.permute.xlu0 %1403
      %1405 = vrot.lane.b32.xlu0 %v1310, 48
      %v1406 = vpop.permute.xlu0 %1405
      %vm1439 = vcmask 458112
      %1440 = vst.msk [vmem:[#allocation2] sm:$0xff] %vm1439, %v1344
      %1441 = vst.msk [vmem:[#allocation2 + $0x8] sm:$0xff] %vm1439, %v1346
      %1442 = vst.msk [vmem:[#allocation2 + $0x10] sm:$0xff] %vm1439, %v1348
      %1443 = vst.msk [vmem:[#allocation2 + $0x18] sm:$0xff] %vm1439, %v1350
      %1444 = vst.msk [vmem:[#allocation2 + $0x20] sm:$0xff] %vm1439, %v1352
      %1445 = vst.msk [vmem:[#allocation2 + $0x28] sm:$0xff] %vm1439, %v1354
      %1446 = vst.msk [vmem:[#allocation2 + $0x30] sm:$0xff] %vm1439, %v1356
      %1447 = vst.msk [vmem:[#allocation2 + $0x38] sm:$0xff] %vm1439, %v1358
      %1448 = vst.msk [vmem:[#allocation2 + $0x40] sm:$0xff] %vm1439, %v1360
      %1449 = vst.msk [vmem:[#allocation2 + $0x48] sm:$0xff] %vm1439, %v1362
      %1450 = vst.msk [vmem:[#allocation2 + $0x50] sm:$0xff] %vm1439, %v1364
      %1451 = vst.msk [vmem:[#allocation2 + $0x58] sm:$0xff] %vm1439, %v1366
      %1452 = vst.msk [vmem:[#allocation2 + $0x60] sm:$0xff] %vm1439, %v1368
      %1453 = vst.msk [vmem:[#allocation2 + $0x68] sm:$0xff] %vm1439, %v1370
      %1454 = vst.msk [vmem:[#allocation2 + $0x70] sm:$0xff] %vm1439, %v1372
      %1455 = vst.msk [vmem:[#allocation2 + $0x78] sm:$0xff] %vm1439, %v1374
      %1456 = vst.msk [vmem:[#allocation2 + $0x80] sm:$0xff] %vm1439, %v1376
      %1457 = vst.msk [vmem:[#allocation2 + $0x88] sm:$0xff] %vm1439, %v1378
      %1458 = vst.msk [vmem:[#allocation2 + $0x90] sm:$0xff] %vm1439, %v1380
      %1459 = vst.msk [vmem:[#allocation2 + $0x98] sm:$0xff] %vm1439, %v1382
      %1460 = vst.msk [vmem:[#allocation2 + $0xa0] sm:$0xff] %vm1439, %v1384
      %1461 = vst.msk [vmem:[#allocation2 + $0xa8] sm:$0xff] %vm1439, %v1386
      %1462 = vst.msk [vmem:[#allocation2 + $0xb0] sm:$0xff] %vm1439, %v1388
      %1463 = vst.msk [vmem:[#allocation2 + $0xb8] sm:$0xff] %vm1439, %v1390
      %1464 = vst.msk [vmem:[#allocation2 + $0xc0] sm:$0xff] %vm1439, %v1392
      %1465 = vst.msk [vmem:[#allocation2 + $0xc8] sm:$0xff] %vm1439, %v1394
      %1466 = vst.msk [vmem:[#allocation2 + $0xd0] sm:$0xff] %vm1439, %v1396
      %1467 = vst.msk [vmem:[#allocation2 + $0xd8] sm:$0xff] %vm1439, %v1398
      %1468 = vst.msk [vmem:[#allocation2 + $0xe0] sm:$0xff] %vm1439, %v1400
      %1469 = vst.msk [vmem:[#allocation2 + $0xe8] sm:$0xff] %vm1439, %v1402
      %1470 = vst.msk [vmem:[#allocation2 + $0xf0] sm:$0xff] %vm1439, %v1404
      %1471 = vst.msk [vmem:[#allocation2 + $0xf8] sm:$0xff] %vm1439, %v1406
      %v1472 = vld [vmem:[%s1278 + $0x1] sm:$0xff]
      %v1473 = vld [vmem:[%s1278 + $0x9] sm:$0xff]
      %v1474 = vld [vmem:[%s1278 + $0x19] sm:$0xff]
      %v1475 = vld [vmem:[%s1278 + $0x21] sm:$0xff]
      %v1476 = vld [vmem:[%s1278 + $0x31] sm:$0xff]
      %v1477 = vld [vmem:[%s1278 + $0x39] sm:$0xff]
      %v1478 = vld [vmem:[%s1278 + $0x49] sm:$0xff]
      %v1479 = vld [vmem:[%s1278 + $0x51] sm:$0xff]
      %v1480 = vld [vmem:[%s1278 + $0x61] sm:$0xff]
      %v1481 = vld [vmem:[%s1278 + $0x69] sm:$0xff]
      %v1482 = vld [vmem:[%s1278 + $0x79] sm:$0xff]
      %v1483 = vld [vmem:[%s1278 + $0x81] sm:$0xff]
      %v1484 = vld [vmem:[%s1278 + $0x91] sm:$0xff]
      %v1485 = vld [vmem:[%s1278 + $0x99] sm:$0xff]
      %v1486 = vld [vmem:[%s1278 + $0xa9] sm:$0xff]
      %v1487 = vld [vmem:[%s1278 + $0xb1] sm:$0xff]
      %v1488 = vld [vmem:[%s1278 + $0xc1] sm:$0xff]
      %v1489 = vld [vmem:[%s1278 + $0xc9] sm:$0xff]
      %v1490 = vld [vmem:[%s1278 + $0xd9] sm:$0xff]
      %v1491 = vld [vmem:[%s1278 + $0xe1] sm:$0xff]
      %v1492 = vld [vmem:[%s1278 + $0xf1] sm:$0xff]
      %v1493 = vld [vmem:[%s1278 + $0xf9] sm:$0xff]
      %v1494 = vld [vmem:[%s1278 + $0x109] sm:$0xff]
      %v1495 = vld [vmem:[%s1278 + $0x111] sm:$0xff]
      %v1496 = vld [vmem:[%s1278 + $0x121] sm:$0xff]
      %v1497 = vld [vmem:[%s1278 + $0x129] sm:$0xff]
      %v1498 = vld [vmem:[%s1278 + $0x139] sm:$0xff]
      %v1499 = vld [vmem:[%s1278 + $0x141] sm:$0xff]
      %v1500 = vld [vmem:[%s1278 + $0x151] sm:$0xff]
      %v1501 = vld [vmem:[%s1278 + $0x159] sm:$0xff]
      %v1502 = vld [vmem:[%s1278 + $0x169] sm:$0xff]
      %v1503 = vld [vmem:[%s1278 + $0x171] sm:$0xff]
      %1536 = vrot.lane.b32.xlu0 %v1472, 56
      %v1537 = vpop.permute.xlu0 %1536
      %1538 = vrot.lane.b32.xlu0 %v1473, 56
      %v1539 = vpop.permute.xlu0 %1538
      %1540 = vrot.lane.b32.xlu0 %v1474, 56
      %v1541 = vpop.permute.xlu0 %1540
      %1542 = vrot.lane.b32.xlu0 %v1475, 56
      %v1543 = vpop.permute.xlu0 %1542
      %1544 = vrot.lane.b32.xlu0 %v1476, 56
      %v1545 = vpop.permute.xlu0 %1544
      %1546 = vrot.lane.b32.xlu0 %v1477, 56
      %v1547 = vpop.permute.xlu0 %1546
      %1548 = vrot.lane.b32.xlu0 %v1478, 56
      %v1549 = vpop.permute.xlu0 %1548
      %1550 = vrot.lane.b32.xlu0 %v1479, 56
      %v1551 = vpop.permute.xlu0 %1550
      %1552 = vrot.lane.b32.xlu0 %v1480, 56
      %v1553 = vpop.permute.xlu0 %1552
      %1554 = vrot.lane.b32.xlu0 %v1481, 56
      %v1555 = vpop.permute.xlu0 %1554
      %1556 = vrot.lane.b32.xlu0 %v1482, 56
      %v1557 = vpop.permute.xlu0 %1556
      %1558 = vrot.lane.b32.xlu0 %v1483, 56
      %v1559 = vpop.permute.xlu0 %1558
      %1560 = vrot.lane.b32.xlu0 %v1484, 56
      %v1561 = vpop.permute.xlu0 %1560
      %1562 = vrot.lane.b32.xlu0 %v1485, 56
      %v1563 = vpop.permute.xlu0 %1562
      %1564 = vrot.lane.b32.xlu0 %v1486, 56
      %v1565 = vpop.permute.xlu0 %1564
      %1566 = vrot.lane.b32.xlu0 %v1487, 56
      %v1567 = vpop.permute.xlu0 %1566
      %1568 = vrot.lane.b32.xlu0 %v1488, 56
      %v1569 = vpop.permute.xlu0 %1568
      %1570 = vrot.lane.b32.xlu0 %v1489, 56
      %v1571 = vpop.permute.xlu0 %1570
      %1572 = vrot.lane.b32.xlu0 %v1490, 56
      %v1573 = vpop.permute.xlu0 %1572
      %1574 = vrot.lane.b32.xlu0 %v1491, 56
      %v1575 = vpop.permute.xlu0 %1574
      %1576 = vrot.lane.b32.xlu0 %v1492, 56
      %v1577 = vpop.permute.xlu0 %1576
      %1578 = vrot.lane.b32.xlu0 %v1493, 56
      %v1579 = vpop.permute.xlu0 %1578
      %1580 = vrot.lane.b32.xlu0 %v1494, 56
      %v1581 = vpop.permute.xlu0 %1580
      %1582 = vrot.lane.b32.xlu0 %v1495, 56
      %v1583 = vpop.permute.xlu0 %1582
      %1584 = vrot.lane.b32.xlu0 %v1496, 56
      %v1585 = vpop.permute.xlu0 %1584
      %1586 = vrot.lane.b32.xlu0 %v1497, 56
      %v1587 = vpop.permute.xlu0 %1586
      %1588 = vrot.lane.b32.xlu0 %v1498, 56
      %v1589 = vpop.permute.xlu0 %1588
      %1590 = vrot.lane.b32.xlu0 %v1499, 56
      %v1591 = vpop.permute.xlu0 %1590
      %1592 = vrot.lane.b32.xlu0 %v1500, 56
      %v1593 = vpop.permute.xlu0 %1592
      %1594 = vrot.lane.b32.xlu0 %v1501, 56
      %v1595 = vpop.permute.xlu0 %1594
      %1596 = vrot.lane.b32.xlu0 %v1502, 56
      %v1597 = vpop.permute.xlu0 %1596
      %1598 = vrot.lane.b32.xlu0 %v1503, 56
      %v1599 = vpop.permute.xlu0 %1598
      %vm1632 = vcmask 523712
      %1633 = vst.msk [vmem:[#allocation2] sm:$0xff] %vm1632, %v1537
      %1634 = vst.msk [vmem:[#allocation2 + $0x8] sm:$0xff] %vm1632, %v1539
      %1635 = vst.msk [vmem:[#allocation2 + $0x10] sm:$0xff] %vm1632, %v1541
      %1636 = vst.msk [vmem:[#allocation2 + $0x18] sm:$0xff] %vm1632, %v1543
      %1637 = vst.msk [vmem:[#allocation2 + $0x20] sm:$0xff] %vm1632, %v1545
      %1638 = vst.msk [vmem:[#allocation2 + $0x28] sm:$0xff] %vm1632, %v1547
      %1639 = vst.msk [vmem:[#allocation2 + $0x30] sm:$0xff] %vm1632, %v1549
      %1640 = vst.msk [vmem:[#allocation2 + $0x38] sm:$0xff] %vm1632, %v1551
      %1641 = vst.msk [vmem:[#allocation2 + $0x40] sm:$0xff] %vm1632, %v1553
      %1642 = vst.msk [vmem:[#allocation2 + $0x48] sm:$0xff] %vm1632, %v1555
      %1643 = vst.msk [vmem:[#allocation2 + $0x50] sm:$0xff] %vm1632, %v1557
      %1644 = vst.msk [vmem:[#allocation2 + $0x58] sm:$0xff] %vm1632, %v1559
      %1645 = vst.msk [vmem:[#allocation2 + $0x60] sm:$0xff] %vm1632, %v1561
      %1646 = vst.msk [vmem:[#allocation2 + $0x68] sm:$0xff] %vm1632, %v1563
      %1647 = vst.msk [vmem:[#allocation2 + $0x70] sm:$0xff] %vm1632, %v1565
      %1648 = vst.msk [vmem:[#allocation2 + $0x78] sm:$0xff] %vm1632, %v1567
      %1649 = vst.msk [vmem:[#allocation2 + $0x80] sm:$0xff] %vm1632, %v1569
      %1650 = vst.msk [vmem:[#allocation2 + $0x88] sm:$0xff] %vm1632, %v1571
      %1651 = vst.msk [vmem:[#allocation2 + $0x90] sm:$0xff] %vm1632, %v1573
      %1652 = vst.msk [vmem:[#allocation2 + $0x98] sm:$0xff] %vm1632, %v1575
      %1653 = vst.msk [vmem:[#allocation2 + $0xa0] sm:$0xff] %vm1632, %v1577
      %1654 = vst.msk [vmem:[#allocation2 + $0xa8] sm:$0xff] %vm1632, %v1579
      %1655 = vst.msk [vmem:[#allocation2 + $0xb0] sm:$0xff] %vm1632, %v1581
      %1656 = vst.msk [vmem:[#allocation2 + $0xb8] sm:$0xff] %vm1632, %v1583
      %1657 = vst.msk [vmem:[#allocation2 + $0xc0] sm:$0xff] %vm1632, %v1585
      %1658 = vst.msk [vmem:[#allocation2 + $0xc8] sm:$0xff] %vm1632, %v1587
      %1659 = vst.msk [vmem:[#allocation2 + $0xd0] sm:$0xff] %vm1632, %v1589
      %1660 = vst.msk [vmem:[#allocation2 + $0xd8] sm:$0xff] %vm1632, %v1591
      %1661 = vst.msk [vmem:[#allocation2 + $0xe0] sm:$0xff] %vm1632, %v1593
      %1662 = vst.msk [vmem:[#allocation2 + $0xe8] sm:$0xff] %vm1632, %v1595
      %1663 = vst.msk [vmem:[#allocation2 + $0xf0] sm:$0xff] %vm1632, %v1597
      %1664 = vst.msk [vmem:[#allocation2 + $0xf8] sm:$0xff] %vm1632, %v1599
      %v1665 = vld [vmem:[%s1278 + $0x2] sm:$0xff]
      %v1666 = vld [vmem:[%s1278 + $0xa] sm:$0xff]
      %v1667 = vld [vmem:[%s1278 + $0x1a] sm:$0xff]
      %v1668 = vld [vmem:[%s1278 + $0x22] sm:$0xff]
      %v1669 = vld [vmem:[%s1278 + $0x32] sm:$0xff]
      %v1670 = vld [vmem:[%s1278 + $0x3a] sm:$0xff]
      %v1671 = vld [vmem:[%s1278 + $0x4a] sm:$0xff]
      %v1672 = vld [vmem:[%s1278 + $0x52] sm:$0xff]
      %v1673 = vld [vmem:[%s1278 + $0x62] sm:$0xff]
      %v1674 = vld [vmem:[%s1278 + $0x6a] sm:$0xff]
      %v1675 = vld [vmem:[%s1278 + $0x7a] sm:$0xff]
      %v1676 = vld [vmem:[%s1278 + $0x82] sm:$0xff]
      %v1677 = vld [vmem:[%s1278 + $0x92] sm:$0xff]
      %v1678 = vld [vmem:[%s1278 + $0x9a] sm:$0xff]
      %v1679 = vld [vmem:[%s1278 + $0xaa] sm:$0xff]
      %v1680 = vld [vmem:[%s1278 + $0xb2] sm:$0xff]
      %v1681 = vld [vmem:[%s1278 + $0xc2] sm:$0xff]
      %v1682 = vld [vmem:[%s1278 + $0xca] sm:$0xff]
      %v1683 = vld [vmem:[%s1278 + $0xda] sm:$0xff]
      %v1684 = vld [vmem:[%s1278 + $0xe2] sm:$0xff]
      %v1685 = vld [vmem:[%s1278 + $0xf2] sm:$0xff]
      %v1686 = vld [vmem:[%s1278 + $0xfa] sm:$0xff]
      %v1687 = vld [vmem:[%s1278 + $0x10a] sm:$0xff]
      %v1688 = vld [vmem:[%s1278 + $0x112] sm:$0xff]
      %v1689 = vld [vmem:[%s1278 + $0x122] sm:$0xff]
      %v1690 = vld [vmem:[%s1278 + $0x12a] sm:$0xff]
      %v1691 = vld [vmem:[%s1278 + $0x13a] sm:$0xff]
      %v1692 = vld [vmem:[%s1278 + $0x142] sm:$0xff]
      %v1693 = vld [vmem:[%s1278 + $0x152] sm:$0xff]
      %v1694 = vld [vmem:[%s1278 + $0x15a] sm:$0xff]
      %v1695 = vld [vmem:[%s1278 + $0x16a] sm:$0xff]
      %v1696 = vld [vmem:[%s1278 + $0x172] sm:$0xff]
      %1729 = vrot.lane.b32.xlu0 %v1665, 64
      %v1730 = vpop.permute.xlu0 %1729
      %1731 = vrot.lane.b32.xlu0 %v1666, 64
      %v1732 = vpop.permute.xlu0 %1731
      %1733 = vrot.lane.b32.xlu0 %v1667, 64
      %v1734 = vpop.permute.xlu0 %1733
      %1735 = vrot.lane.b32.xlu0 %v1668, 64
      %v1736 = vpop.permute.xlu0 %1735
      %1737 = vrot.lane.b32.xlu0 %v1669, 64
      %v1738 = vpop.permute.xlu0 %1737
      %1739 = vrot.lane.b32.xlu0 %v1670, 64
      %v1740 = vpop.permute.xlu0 %1739
      %1741 = vrot.lane.b32.xlu0 %v1671, 64
      %v1742 = vpop.permute.xlu0 %1741
      %1743 = vrot.lane.b32.xlu0 %v1672, 64
      %v1744 = vpop.permute.xlu0 %1743
      %1745 = vrot.lane.b32.xlu0 %v1673, 64
      %v1746 = vpop.permute.xlu0 %1745
      %1747 = vrot.lane.b32.xlu0 %v1674, 64
      %v1748 = vpop.permute.xlu0 %1747
      %1749 = vrot.lane.b32.xlu0 %v1675, 64
      %v1750 = vpop.permute.xlu0 %1749
      %1751 = vrot.lane.b32.xlu0 %v1676, 64
      %v1752 = vpop.permute.xlu0 %1751
      %1753 = vrot.lane.b32.xlu0 %v1677, 64
      %v1754 = vpop.permute.xlu0 %1753
      %1755 = vrot.lane.b32.xlu0 %v1678, 64
      %v1756 = vpop.permute.xlu0 %1755
      %1757 = vrot.lane.b32.xlu0 %v1679, 64
      %v1758 = vpop.permute.xlu0 %1757
      %1759 = vrot.lane.b32.xlu0 %v1680, 64
      %v1760 = vpop.permute.xlu0 %1759
      %1761 = vrot.lane.b32.xlu0 %v1681, 64
      %v1762 = vpop.permute.xlu0 %1761
      %1763 = vrot.lane.b32.xlu0 %v1682, 64
      %v1764 = vpop.permute.xlu0 %1763
      %1765 = vrot.lane.b32.xlu0 %v1683, 64
      %v1766 = vpop.permute.xlu0 %1765
      %1767 = vrot.lane.b32.xlu0 %v1684, 64
      %v1768 = vpop.permute.xlu0 %1767
      %1769 = vrot.lane.b32.xlu0 %v1685, 64
      %v1770 = vpop.permute.xlu0 %1769
      %1771 = vrot.lane.b32.xlu0 %v1686, 64
      %v1772 = vpop.permute.xlu0 %1771
      %1773 = vrot.lane.b32.xlu0 %v1687, 64
      %v1774 = vpop.permute.xlu0 %1773
      %1775 = vrot.lane.b32.xlu0 %v1688, 64
      %v1776 = vpop.permute.xlu0 %1775
      %1777 = vrot.lane.b32.xlu0 %v1689, 64
      %v1778 = vpop.permute.xlu0 %1777
      %1779 = vrot.lane.b32.xlu0 %v1690, 64
      %v1780 = vpop.permute.xlu0 %1779
      %1781 = vrot.lane.b32.xlu0 %v1691, 64
      %v1782 = vpop.permute.xlu0 %1781
      %1783 = vrot.lane.b32.xlu0 %v1692, 64
      %v1784 = vpop.permute.xlu0 %1783
      %1785 = vrot.lane.b32.xlu0 %v1693, 64
      %v1786 = vpop.permute.xlu0 %1785
      %1787 = vrot.lane.b32.xlu0 %v1694, 64
      %v1788 = vpop.permute.xlu0 %1787
      %1789 = vrot.lane.b32.xlu0 %v1695, 64
      %v1790 = vpop.permute.xlu0 %1789
      %1791 = vrot.lane.b32.xlu0 %v1696, 64
      %v1792 = vpop.permute.xlu0 %1791
      %vm1825 = vcmask 589312
      %1826 = vst.msk [vmem:[#allocation2] sm:$0xff] %vm1825, %v1730
      %1827 = vst.msk [vmem:[#allocation2 + $0x8] sm:$0xff] %vm1825, %v1732
      %1828 = vst.msk [vmem:[#allocation2 + $0x10] sm:$0xff] %vm1825, %v1734
      %1829 = vst.msk [vmem:[#allocation2 + $0x18] sm:$0xff] %vm1825, %v1736
      %1830 = vst.msk [vmem:[#allocation2 + $0x20] sm:$0xff] %vm1825, %v1738
      %1831 = vst.msk [vmem:[#allocation2 + $0x28] sm:$0xff] %vm1825, %v1740
      %1832 = vst.msk [vmem:[#allocation2 + $0x30] sm:$0xff] %vm1825, %v1742
      %1833 = vst.msk [vmem:[#allocation2 + $0x38] sm:$0xff] %vm1825, %v1744
      %1834 = vst.msk [vmem:[#allocation2 + $0x40] sm:$0xff] %vm1825, %v1746
      %1835 = vst.msk [vmem:[#allocation2 + $0x48] sm:$0xff] %vm1825, %v1748
      %1836 = vst.msk [vmem:[#allocation2 + $0x50] sm:$0xff] %vm1825, %v1750
      %1837 = vst.msk [vmem:[#allocation2 + $0x58] sm:$0xff] %vm1825, %v1752
      %1838 = vst.msk [vmem:[#allocation2 + $0x60] sm:$0xff] %vm1825, %v1754
      %1839 = vst.msk [vmem:[#allocation2 + $0x68] sm:$0xff] %vm1825, %v1756
      %1840 = vst.msk [vmem:[#allocation2 + $0x70] sm:$0xff] %vm1825, %v1758
      %1841 = vst.msk [vmem:[#allocation2 + $0x78] sm:$0xff] %vm1825, %v1760
      %1842 = vst.msk [vmem:[#allocation2 + $0x80] sm:$0xff] %vm1825, %v1762
      %1843 = vst.msk [vmem:[#allocation2 + $0x88] sm:$0xff] %vm1825, %v1764
      %1844 = vst.msk [vmem:[#allocation2 + $0x90] sm:$0xff] %vm1825, %v1766
      %1845 = vst.msk [vmem:[#allocation2 + $0x98] sm:$0xff] %vm1825, %v1768
      %1846 = vst.msk [vmem:[#allocation2 + $0xa0] sm:$0xff] %vm1825, %v1770
      %1847 = vst.msk [vmem:[#allocation2 + $0xa8] sm:$0xff] %vm1825, %v1772
      %1848 = vst.msk [vmem:[#allocation2 + $0xb0] sm:$0xff] %vm1825, %v1774
      %1849 = vst.msk [vmem:[#allocation2 + $0xb8] sm:$0xff] %vm1825, %v1776
      %1850 = vst.msk [vmem:[#allocation2 + $0xc0] sm:$0xff] %vm1825, %v1778
      %1851 = vst.msk [vmem:[#allocation2 + $0xc8] sm:$0xff] %vm1825, %v1780
      %1852 = vst.msk [vmem:[#allocation2 + $0xd0] sm:$0xff] %vm1825, %v1782
      %1853 = vst.msk [vmem:[#allocation2 + $0xd8] sm:$0xff] %vm1825, %v1784
      %1854 = vst.msk [vmem:[#allocation2 + $0xe0] sm:$0xff] %vm1825, %v1786
      %1855 = vst.msk [vmem:[#allocation2 + $0xe8] sm:$0xff] %vm1825, %v1788
      %1856 = vst.msk [vmem:[#allocation2 + $0xf0] sm:$0xff] %vm1825, %v1790
      %1857 = vst.msk [vmem:[#allocation2 + $0xf8] sm:$0xff] %vm1825, %v1792
      %v1858 = vld [vmem:[#allocation2] sm:$0xff]
      %v1859 = vld [vmem:[#allocation2 + $0x8] sm:$0xff]
      %v1860 = vld [vmem:[#allocation2 + $0x10] sm:$0xff]
      %v1861 = vld [vmem:[#allocation2 + $0x18] sm:$0xff]
      %v1862 = vld [vmem:[#allocation2 + $0x20] sm:$0xff]
      %v1863 = vld [vmem:[#allocation2 + $0x28] sm:$0xff]
      %v1864 = vld [vmem:[#allocation2 + $0x30] sm:$0xff]
      %v1865 = vld [vmem:[#allocation2 + $0x38] sm:$0xff]
      %v1866 = vld [vmem:[#allocation2 + $0x40] sm:$0xff]
      %v1867 = vld [vmem:[#allocation2 + $0x48] sm:$0xff]
      %v1868 = vld [vmem:[#allocation2 + $0x50] sm:$0xff]
      %v1869 = vld [vmem:[#allocation2 + $0x58] sm:$0xff]
      %v1870 = vld [vmem:[#allocation2 + $0x60] sm:$0xff]
      %v1871 = vld [vmem:[#allocation2 + $0x68] sm:$0xff]
      %v1872 = vld [vmem:[#allocation2 + $0x70] sm:$0xff]
      %v1873 = vld [vmem:[#allocation2 + $0x78] sm:$0xff]
      %v1874 = vld [vmem:[#allocation2 + $0x80] sm:$0xff]
      %v1875 = vld [vmem:[#allocation2 + $0x88] sm:$0xff]
      %v1876 = vld [vmem:[#allocation2 + $0x90] sm:$0xff]
      %v1877 = vld [vmem:[#allocation2 + $0x98] sm:$0xff]
      %v1878 = vld [vmem:[#allocation2 + $0xa0] sm:$0xff]
      %v1879 = vld [vmem:[#allocation2 + $0xa8] sm:$0xff]
      %v1880 = vld [vmem:[#allocation2 + $0xb0] sm:$0xff]
      %v1881 = vld [vmem:[#allocation2 + $0xb8] sm:$0xff]
      %v1882 = vld [vmem:[#allocation2 + $0xc0] sm:$0xff]
      %v1883 = vld [vmem:[#allocation2 + $0xc8] sm:$0xff]
      %v1884 = vld [vmem:[#allocation2 + $0xd0] sm:$0xff]
      %v1885 = vld [vmem:[#allocation2 + $0xd8] sm:$0xff]
      %v1886 = vld [vmem:[#allocation2 + $0xe0] sm:$0xff]
      %v1887 = vld [vmem:[#allocation2 + $0xe8] sm:$0xff]
      %v1888 = vld [vmem:[#allocation2 + $0xf0] sm:$0xff]
      %v1889 = vld [vmem:[#allocation2 + $0xf8] sm:$0xff]
      %v1890 = vld [vmem:[%s1] sm:$0xff]
      %v1891 = vld [vmem:[%s1 + $0x8] sm:$0xff]
      %v1892 = vld [vmem:[%s1 + $0x10] sm:$0xff]
      %v1893 = vld [vmem:[%s1 + $0x18] sm:$0xff]
      %v1894 = vld [vmem:[%s1 + $0x20] sm:$0xff]
      %v1895 = vld [vmem:[%s1 + $0x28] sm:$0xff]
      %v1896 = vld [vmem:[%s1 + $0x30] sm:$0xff]
      %v1897 = vld [vmem:[%s1 + $0x38] sm:$0xff]
      %v1898 = vld [vmem:[%s1 + $0x40] sm:$0xff]
      %vm1899 = vcmask 588800
      %v1901 = vsel %vm1899, %v1858, 0
      %v1904 = vsel %vm1899, %v1859, 0
      %v1907 = vsel %vm1899, %v1860, 0
      %v1910 = vsel %vm1899, %v1861, 0
      %v1913 = vsel %vm1899, %v1862, 0
      %v1916 = vsel %vm1899, %v1863, 0
      %v1919 = vsel %vm1899, %v1864, 0
      %v1922 = vsel %vm1899, %v1865, 0
      %v1925 = vsel %vm1899, %v1866, 0
      %v1928 = vsel %vm1899, %v1867, 0
      %v1931 = vsel %vm1899, %v1868, 0
      %v1934 = vsel %vm1899, %v1869, 0
      %v1937 = vsel %vm1899, %v1870, 0
      %v1940 = vsel %vm1899, %v1871, 0
      %v1943 = vsel %vm1899, %v1872, 0
      %v1946 = vsel %vm1899, %v1873, 0
      %v1949 = vsel %vm1899, %v1874, 0
      %v1952 = vsel %vm1899, %v1875, 0
      %v1955 = vsel %vm1899, %v1876, 0
      %v1958 = vsel %vm1899, %v1877, 0
      %v1961 = vsel %vm1899, %v1878, 0
      %v1964 = vsel %vm1899, %v1879, 0
      %v1967 = vsel %vm1899, %v1880, 0
      %v1970 = vsel %vm1899, %v1881, 0
      %v1973 = vsel %vm1899, %v1882, 0
      %v1976 = vsel %vm1899, %v1883, 0
      %v1979 = vsel %vm1899, %v1884, 0
      %v1982 = vsel %vm1899, %v1885, 0
      %v1985 = vsel %vm1899, %v1886, 0
      %v1988 = vsel %vm1899, %v1887, 0
      %v1991 = vsel %vm1899, %v1888, 0
      %v1994 = vsel %vm1899, %v1889, 0
      %1996 = vmatprep.subr.mxu0 0.0
      %1997 = vmatpush1.msra.mxu0 %v1890
      %1998 = vmatprep.subr.mxu0 0.0
      %1999 = vmatpush1.msra.mxu0 %v1891
      %2000 = vmatprep.subr.mxu0 0.0
      %2001 = vmatpush1.msra.mxu0 %v1892
      %2002 = vmatprep.subr.mxu0 0.0
      %2003 = vmatpush1.msra.mxu0 %v1893
      %2004 = vmatprep.subr.mxu0 0.0
      %2005 = vmatpush1.msra.mxu0 %v1894
      %2006 = vmatprep.subr.mxu0 0.0
      %2007 = vmatpush1.msra.mxu0 %v1895
      %2008 = vmatprep.subr.mxu0 0.0
      %2009 = vmatpush1.msra.mxu0 %v1896
      %2010 = vmatprep.subr.mxu0 0.0
      %2011 = vmatpush1.msra.mxu0 %v1897
      %2012 = vmatprep.subr.mxu0 0.0
      %2013 = vmatpush1.msra.mxu0 %v1898
      %2014 = vmatprep.subr.mxu0 0.0
      %2015 = vmatpush1.msra.mxu0 0.0
      %2016 = vmatprep.subr.mxu0 0.0
      %2017 = vmatpush1.msra.mxu0 0.0
      %2018 = vmatprep.subr.mxu0 0.0
      %2019 = vmatpush1.msra.mxu0 0.0
      %2020 = vmatprep.subr.mxu0 0.0
      %2021 = vmatpush1.msra.mxu0 0.0
      %2022 = vmatprep.subr.mxu0 0.0
      %2023 = vmatpush1.msra.mxu0 0.0
      %2024 = vmatprep.subr.mxu0 0.0
      %2025 = vmatpush1.msra.mxu0 0.0
      %2026 = vmatprep.subr.mxu0 0.0
      %2027 = vmatpush1.msra.mxu0 0.0
      %2028 = vmatprep.subr.mxu0 0.0
      %2029 = vmatpush1.msra.mxu0 0.0
      %2030 = vmatprep.subr.mxu0 0.0
      %2031 = vmatpush1.msra.mxu0 0.0
      %2032 = vmatprep.subr.mxu0 0.0
      %2033 = vmatpush1.msra.mxu0 0.0
      %2034 = vmatprep.subr.mxu0 0.0
      %2035 = vmatpush1.msra.mxu0 0.0
      %2036 = vmatprep.subr.mxu0 0.0
      %2037 = vmatpush1.msra.mxu0 0.0
      %2038 = vmatprep.subr.mxu0 0.0
      %2039 = vmatpush1.msra.mxu0 0.0
      %2040 = vmatprep.subr.mxu0 0.0
      %2041 = vmatpush1.msra.mxu0 0.0
      %2042 = vmatprep.subr.mxu0 0.0
      %2043 = vmatpush1.msra.mxu0 0.0
      %2044 = vmatprep.subr.mxu0 0.0
      %2045 = vmatpush1.msra.mxu0 0.0
      %2046 = vmatprep.subr.mxu0 0.0
      %2047 = vmatpush1.msra.mxu0 0.0
      %2048 = vmatprep.subr.mxu0 0.0
      %2049 = vmatpush1.msra.mxu0 0.0
      %2050 = vmatprep.subr.mxu0 0.0
      %2051 = vmatpush1.msra.mxu0 0.0
      %2052 = vmatprep.subr.mxu0 0.0
      %2053 = vmatpush1.msra.mxu0 0.0
      %2054 = vmatprep.subr.mxu0 0.0
      %2055 = vmatpush1.msra.mxu0 0.0
      %2056 = vmatprep.subr.mxu0 0.0
      %2057 = vmatpush1.msra.mxu0 0.0
      %2058 = vmatprep.subr.mxu0 0.0
      %2059 = vmatpush1.msra.mxu0 0.0
      %2060 = vmatprep.mubr.f32.mxu0 0.0
      %2061 = vmatmul.mubr.f32.gmra.mrb[0].mxu0 %v1901
      %v2062 = vpop.f32.mrb[0].mxu0
      %v2063 = vadd.f32 0.0, %v2062
      %v2064 = vpop.f32.mrb[0].mxu0
      %2065 = vmatprep.mubr.f32.mxu0 0.0
      %2066 = vmatmul.mubr.f32.gmra.mrb[0].mxu0 %v1904
      %v2067 = vpop.f32.mrb[0].mxu0
      %v2068 = vadd.f32 0.0, %v2067
      %v2069 = vpop.f32.mrb[0].mxu0
      %2070 = vmatprep.mubr.f32.mxu0 0.0
      %2071 = vmatmul.mubr.f32.gmra.mrb[0].mxu0 %v1907
      %v2072 = vpop.f32.mrb[0].mxu0
      %v2073 = vadd.f32 0.0, %v2072
      %v2074 = vpop.f32.mrb[0].mxu0
      %2075 = vmatprep.mubr.f32.mxu0 0.0
      %2076 = vmatmul.mubr.f32.gmra.mrb[0].mxu0 %v1910
      %v2077 = vpop.f32.mrb[0].mxu0
      %v2078 = vadd.f32 0.0, %v2077
      %v2079 = vpop.f32.mrb[0].mxu0
      %2080 = vmatprep.mubr.f32.mxu0 0.0
      %2081 = vmatmul.mubr.f32.gmra.mrb[0].mxu0 %v1913
      %v2082 = vpop.f32.mrb[0].mxu0
      %v2083 = vadd.f32 0.0, %v2082
      %v2084 = vpop.f32.mrb[0].mxu0
      %2085 = vmatprep.mubr.f32.mxu0 0.0
      %2086 = vmatmul.mubr.f32.gmra.mrb[0].mxu0 %v1916
      %v2087 = vpop.f32.mrb[0].mxu0
      %v2088 = vadd.f32 0.0, %v2087
      %v2089 = vpop.f32.mrb[0].mxu0
      %2090 = vmatprep.mubr.f32.mxu0 0.0
      %2091 = vmatmul.mubr.f32.gmra.mrb[0].mxu0 %v1919
      %v2092 = vpop.f32.mrb[0].mxu0
      %v2093 = vadd.f32 0.0, %v2092
      %v2094 = vpop.f32.mrb[0].mxu0
      %2095 = vmatprep.mubr.f32.mxu0 0.0
      %2096 = vmatmul.mubr.f32.gmra.mrb[0].mxu0 %v1922
      %v2097 = vpop.f32.mrb[0].mxu0
      %v2098 = vadd.f32 0.0, %v2097
      %v2099 = vpop.f32.mrb[0].mxu0
      %2100 = vmatprep.mubr.f32.mxu0 0.0
      %2101 = vmatmul.mubr.f32.gmra.mrb[0].mxu0 %v1925
      %v2102 = vpop.f32.mrb[0].mxu0
      %v2103 = vadd.f32 0.0, %v2102
      %v2104 = vpop.f32.mrb[0].mxu0
      %2105 = vmatprep.mubr.f32.mxu0 0.0
      %2106 = vmatmul.mubr.f32.gmra.mrb[0].mxu0 %v1928
      %v2107 = vpop.f32.mrb[0].mxu0
      %v2108 = vadd.f32 0.0, %v2107
      %v2109 = vpop.f32.mrb[0].mxu0
      %2110 = vmatprep.mubr.f32.mxu0 0.0
      %2111 = vmatmul.mubr.f32.gmra.mrb[0].mxu0 %v1931
      %v2112 = vpop.f32.mrb[0].mxu0
      %v2113 = vadd.f32 0.0, %v2112
      %v2114 = vpop.f32.mrb[0].mxu0
      %2115 = vmatprep.mubr.f32.mxu0 0.0
      %2116 = vmatmul.mubr.f32.gmra.mrb[0].mxu0 %v1934
      %v2117 = vpop.f32.mrb[0].mxu0
      %v2118 = vadd.f32 0.0, %v2117
      %v2119 = vpop.f32.mrb[0].mxu0
      %2120 = vmatprep.mubr.f32.mxu0 0.0
      %2121 = vmatmul.mubr.f32.gmra.mrb[0].mxu0 %v1937
      %v2122 = vpop.f32.mrb[0].mxu0
      %v2123 = vadd.f32 0.0, %v2122
      %v2124 = vpop.f32.mrb[0].mxu0
      %2125 = vmatprep.mubr.f32.mxu0 0.0
      %2126 = vmatmul.mubr.f32.gmra.mrb[0].mxu0 %v1940
      %v2127 = vpop.f32.mrb[0].mxu0
      %v2128 = vadd.f32 0.0, %v2127
      %v2129 = vpop.f32.mrb[0].mxu0
      %2130 = vmatprep.mubr.f32.mxu0 0.0
      %2131 = vmatmul.mubr.f32.gmra.mrb[0].mxu0 %v1943
      %v2132 = vpop.f32.mrb[0].mxu0
      %v2133 = vadd.f32 0.0, %v2132
      %v2134 = vpop.f32.mrb[0].mxu0
      %2135 = vmatprep.mubr.f32.mxu0 0.0
      %2136 = vmatmul.mubr.f32.gmra.mrb[0].mxu0 %v1946
      %v2137 = vpop.f32.mrb[0].mxu0
      %v2138 = vadd.f32 0.0, %v2137
      %v2139 = vpop.f32.mrb[0].mxu0
      %2140 = vmatprep.mubr.f32.mxu0 0.0
      %2141 = vmatmul.mubr.f32.gmra.mrb[0].mxu0 %v1949
      %v2142 = vpop.f32.mrb[0].mxu0
      %v2143 = vadd.f32 0.0, %v2142
      %v2144 = vpop.f32.mrb[0].mxu0
      %2145 = vmatprep.mubr.f32.mxu0 0.0
      %2146 = vmatmul.mubr.f32.gmra.mrb[0].mxu0 %v1952
      %v2147 = vpop.f32.mrb[0].mxu0
      %v2148 = vadd.f32 0.0, %v2147
      %v2149 = vpop.f32.mrb[0].mxu0
      %2150 = vmatprep.mubr.f32.mxu0 0.0
      %2151 = vmatmul.mubr.f32.gmra.mrb[0].mxu0 %v1955
      %v2152 = vpop.f32.mrb[0].mxu0
      %v2153 = vadd.f32 0.0, %v2152
      %v2154 = vpop.f32.mrb[0].mxu0
      %2155 = vmatprep.mubr.f32.mxu0 0.0
      %2156 = vmatmul.mubr.f32.gmra.mrb[0].mxu0 %v1958
      %v2157 = vpop.f32.mrb[0].mxu0
      %v2158 = vadd.f32 0.0, %v2157
      %v2159 = vpop.f32.mrb[0].mxu0
      %2160 = vmatprep.mubr.f32.mxu0 0.0
      %2161 = vmatmul.mubr.f32.gmra.mrb[0].mxu0 %v1961
      %v2162 = vpop.f32.mrb[0].mxu0
      %v2163 = vadd.f32 0.0, %v2162
      %v2164 = vpop.f32.mrb[0].mxu0
      %2165 = vmatprep.mubr.f32.mxu0 0.0
      %2166 = vmatmul.mubr.f32.gmra.mrb[0].mxu0 %v1964
      %v2167 = vpop.f32.mrb[0].mxu0
      %v2168 = vadd.f32 0.0, %v2167
      %v2169 = vpop.f32.mrb[0].mxu0
      %2170 = vmatprep.mubr.f32.mxu0 0.0
      %2171 = vmatmul.mubr.f32.gmra.mrb[0].mxu0 %v1967
      %v2172 = vpop.f32.mrb[0].mxu0
      %v2173 = vadd.f32 0.0, %v2172
      %v2174 = vpop.f32.mrb[0].mxu0
      %2175 = vmatprep.mubr.f32.mxu0 0.0
      %2176 = vmatmul.mubr.f32.gmra.mrb[0].mxu0 %v1970
      %v2177 = vpop.f32.mrb[0].mxu0
      %v2178 = vadd.f32 0.0, %v2177
      %v2179 = vpop.f32.mrb[0].mxu0
      %2180 = vmatprep.mubr.f32.mxu0 0.0
      %2181 = vmatmul.mubr.f32.gmra.mrb[0].mxu0 %v1973
      %v2182 = vpop.f32.mrb[0].mxu0
      %v2183 = vadd.f32 0.0, %v2182
      %v2184 = vpop.f32.mrb[0].mxu0
      %2185 = vmatprep.mubr.f32.mxu0 0.0
      %2186 = vmatmul.mubr.f32.gmra.mrb[0].mxu0 %v1976
      %v2187 = vpop.f32.mrb[0].mxu0
      %v2188 = vadd.f32 0.0, %v2187
      %v2189 = vpop.f32.mrb[0].mxu0
      %2190 = vmatprep.mubr.f32.mxu0 0.0
      %2191 = vmatmul.mubr.f32.gmra.mrb[0].mxu0 %v1979
      %v2192 = vpop.f32.mrb[0].mxu0
      %v2193 = vadd.f32 0.0, %v2192
      %v2194 = vpop.f32.mrb[0].mxu0
      %2195 = vmatprep.mubr.f32.mxu0 0.0
      %2196 = vmatmul.mubr.f32.gmra.mrb[0].mxu0 %v1982
      %v2197 = vpop.f32.mrb[0].mxu0
      %v2198 = vadd.f32 0.0, %v2197
      %v2199 = vpop.f32.mrb[0].mxu0
      %2200 = vmatprep.mubr.f32.mxu0 0.0
      %2201 = vmatmul.mubr.f32.gmra.mrb[0].mxu0 %v1985
      %v2202 = vpop.f32.mrb[0].mxu0
      %v2203 = vadd.f32 0.0, %v2202
      %v2204 = vpop.f32.mrb[0].mxu0
      %2205 = vmatprep.mubr.f32.mxu0 0.0
      %2206 = vmatmul.mubr.f32.gmra.mrb[0].mxu0 %v1988
      %v2207 = vpop.f32.mrb[0].mxu0
      %v2208 = vadd.f32 0.0, %v2207
      %v2209 = vpop.f32.mrb[0].mxu0
      %2210 = vmatprep.mubr.f32.mxu0 0.0
      %2211 = vmatmul.mubr.f32.gmra.mrb[0].mxu0 %v1991
      %v2212 = vpop.f32.mrb[0].mxu0
      %v2213 = vadd.f32 0.0, %v2212
      %v2214 = vpop.f32.mrb[0].mxu0
      %2215 = vmatprep.mubr.f32.mxu0 0.0
      %2216 = vmatmul.mubr.f32.gmra.mrb[0].mxu0 %v1994
      %v2217 = vpop.f32.mrb[0].mxu0
      %v2218 = vadd.f32 0.0, %v2217
      %v2219 = vpop.f32.mrb[0].mxu0
      %2220 = vdwg.mxu0
      %v2221 = vld [vmem:[%s229] sm:$0x1]
      %2222 = vmatprep.subr.mxu0 0.0
      %2223 = vmatpush1.msra.mxu0 %v2063
      %2224 = vmatprep.subr.mxu0 0.0
      %2225 = vmatpush1.msra.mxu0 %v2068
      %2226 = vmatprep.subr.mxu0 0.0
      %2227 = vmatpush1.msra.mxu0 %v2073
      %2228 = vmatprep.subr.mxu0 0.0
      %2229 = vmatpush1.msra.mxu0 %v2078
      %2230 = vmatprep.subr.mxu0 0.0
      %2231 = vmatpush1.msra.mxu0 %v2083
      %2232 = vmatprep.subr.mxu0 0.0
      %2233 = vmatpush1.msra.mxu0 %v2088
      %2234 = vmatprep.subr.mxu0 0.0
      %2235 = vmatpush1.msra.mxu0 %v2093
      %2236 = vmatprep.subr.mxu0 0.0
      %2237 = vmatpush1.msra.mxu0 %v2098
      %2238 = vmatprep.subr.mxu0 0.0
      %2239 = vmatpush1.msra.mxu0 %v2103
      %2240 = vmatprep.subr.mxu0 0.0
      %2241 = vmatpush1.msra.mxu0 %v2108
      %2242 = vmatprep.subr.mxu0 0.0
      %2243 = vmatpush1.msra.mxu0 %v2113
      %2244 = vmatprep.subr.mxu0 0.0
      %2245 = vmatpush1.msra.mxu0 %v2118
      %2246 = vmatprep.subr.mxu0 0.0
      %2247 = vmatpush1.msra.mxu0 %v2123
      %2248 = vmatprep.subr.mxu0 0.0
      %2249 = vmatpush1.msra.mxu0 %v2128
      %2250 = vmatprep.subr.mxu0 0.0
      %2251 = vmatpush1.msra.mxu0 %v2133
      %2252 = vmatprep.subr.mxu0 0.0
      %2253 = vmatpush1.msra.mxu0 %v2138
      %2254 = vmatprep.subr.mxu0 0.0
      %2255 = vmatpush1.msra.mxu0 %v2143
      %2256 = vmatprep.subr.mxu0 0.0
      %2257 = vmatpush1.msra.mxu0 %v2148
      %2258 = vmatprep.subr.mxu0 0.0
      %2259 = vmatpush1.msra.mxu0 %v2153
      %2260 = vmatprep.subr.mxu0 0.0
      %2261 = vmatpush1.msra.mxu0 %v2158
      %2262 = vmatprep.subr.mxu0 0.0
      %2263 = vmatpush1.msra.mxu0 %v2163
      %2264 = vmatprep.subr.mxu0 0.0
      %2265 = vmatpush1.msra.mxu0 %v2168
      %2266 = vmatprep.subr.mxu0 0.0
      %2267 = vmatpush1.msra.mxu0 %v2173
      %2268 = vmatprep.subr.mxu0 0.0
      %2269 = vmatpush1.msra.mxu0 %v2178
      %2270 = vmatprep.subr.mxu0 0.0
      %2271 = vmatpush1.msra.mxu0 %v2183
      %2272 = vmatprep.subr.mxu0 0.0
      %2273 = vmatpush1.msra.mxu0 %v2188
      %2274 = vmatprep.subr.mxu0 0.0
      %2275 = vmatpush1.msra.mxu0 %v2193
      %2276 = vmatprep.subr.mxu0 0.0
      %2277 = vmatpush1.msra.mxu0 %v2198
      %2278 = vmatprep.subr.mxu0 0.0
      %2279 = vmatpush1.msra.mxu0 %v2203
      %2280 = vmatprep.subr.mxu0 0.0
      %2281 = vmatpush1.msra.mxu0 %v2208
      %2282 = vmatprep.subr.mxu0 0.0
      %2283 = vmatpush1.msra.mxu0 %v2213
      %2284 = vmatprep.subr.mxu0 0.0
      %2285 = vmatpush1.msra.mxu0 %v2218
      %2286 = vmatprep.mubr.f32.mxu0 1.0
      %2287 = vmatmul.mubr.f32.gmra.mrb[0].mxu0 1.0
      %v2288 = vpop.f32.mrb[0].mxu0
      %v2289 = vadd.f32 0.0, %v2288
      %v2290 = vpop.f32.mrb[0].mxu0
      %2291 = vdwg.mxu0
      %v2292 = vadd.f32 %v2221, %v2289
      %vm2293 = vcmask 122880
      %2294 = vst.msk [vmem:[%s229] sm:$0x1] %vm2293, %v2292
      %v2295 = vld [vmem:[%s232] sm:$0x1]
      %v2296 = vmul.f32 %v2063, %v2063
      %v2297 = vmul.f32 %v2068, %v2068
      %v2298 = vmul.f32 %v2073, %v2073
      %v2299 = vmul.f32 %v2078, %v2078
      %v2300 = vmul.f32 %v2083, %v2083
      %v2301 = vmul.f32 %v2088, %v2088
      %v2302 = vmul.f32 %v2093, %v2093
      %v2303 = vmul.f32 %v2098, %v2098
      %v2304 = vmul.f32 %v2103, %v2103
      %v2305 = vmul.f32 %v2108, %v2108
      %v2306 = vmul.f32 %v2113, %v2113
      %v2307 = vmul.f32 %v2118, %v2118
      %v2308 = vmul.f32 %v2123, %v2123
      %v2309 = vmul.f32 %v2128, %v2128
      %v2310 = vmul.f32 %v2133, %v2133
      %v2311 = vmul.f32 %v2138, %v2138
      %v2312 = vmul.f32 %v2143, %v2143
      %v2313 = vmul.f32 %v2148, %v2148
      %v2314 = vmul.f32 %v2153, %v2153
      %v2315 = vmul.f32 %v2158, %v2158
      %v2316 = vmul.f32 %v2163, %v2163
      %v2317 = vmul.f32 %v2168, %v2168
      %v2318 = vmul.f32 %v2173, %v2173
      %v2319 = vmul.f32 %v2178, %v2178
      %v2320 = vmul.f32 %v2183, %v2183
      %v2321 = vmul.f32 %v2188, %v2188
      %v2322 = vmul.f32 %v2193, %v2193
      %v2323 = vmul.f32 %v2198, %v2198
      %v2324 = vmul.f32 %v2203, %v2203
      %v2325 = vmul.f32 %v2208, %v2208
      %v2326 = vmul.f32 %v2213, %v2213
      %v2327 = vmul.f32 %v2218, %v2218
      %2328 = vmatprep.subr.mxu0 0.0
      %2329 = vmatpush1.msra.mxu0 %v2296
      %2330 = vmatprep.subr.mxu0 0.0
      %2331 = vmatpush1.msra.mxu0 %v2297
      %2332 = vmatprep.subr.mxu0 0.0
      %2333 = vmatpush1.msra.mxu0 %v2298
      %2334 = vmatprep.subr.mxu0 0.0
      %2335 = vmatpush1.msra.mxu0 %v2299
      %2336 = vmatprep.subr.mxu0 0.0
      %2337 = vmatpush1.msra.mxu0 %v2300
      %2338 = vmatprep.subr.mxu0 0.0
      %2339 = vmatpush1.msra.mxu0 %v2301
      %2340 = vmatprep.subr.mxu0 0.0
      %2341 = vmatpush1.msra.mxu0 %v2302
      %2342 = vmatprep.subr.mxu0 0.0
      %2343 = vmatpush1.msra.mxu0 %v2303
      %2344 = vmatprep.subr.mxu0 0.0
      %2345 = vmatpush1.msra.mxu0 %v2304
      %2346 = vmatprep.subr.mxu0 0.0
      %2347 = vmatpush1.msra.mxu0 %v2305
      %2348 = vmatprep.subr.mxu0 0.0
      %2349 = vmatpush1.msra.mxu0 %v2306
      %2350 = vmatprep.subr.mxu0 0.0
      %2351 = vmatpush1.msra.mxu0 %v2307
      %2352 = vmatprep.subr.mxu0 0.0
      %2353 = vmatpush1.msra.mxu0 %v2308
      %2354 = vmatprep.subr.mxu0 0.0
      %2355 = vmatpush1.msra.mxu0 %v2309
      %2356 = vmatprep.subr.mxu0 0.0
      %2357 = vmatpush1.msra.mxu0 %v2310
      %2358 = vmatprep.subr.mxu0 0.0
      %2359 = vmatpush1.msra.mxu0 %v2311
      %2360 = vmatprep.subr.mxu0 0.0
      %2361 = vmatpush1.msra.mxu0 %v2312
      %2362 = vmatprep.subr.mxu0 0.0
      %2363 = vmatpush1.msra.mxu0 %v2313
      %2364 = vmatprep.subr.mxu0 0.0
      %2365 = vmatpush1.msra.mxu0 %v2314
      %2366 = vmatprep.subr.mxu0 0.0
      %2367 = vmatpush1.msra.mxu0 %v2315
      %2368 = vmatprep.subr.mxu0 0.0
      %2369 = vmatpush1.msra.mxu0 %v2316
      %2370 = vmatprep.subr.mxu0 0.0
      %2371 = vmatpush1.msra.mxu0 %v2317
      %2372 = vmatprep.subr.mxu0 0.0
      %2373 = vmatpush1.msra.mxu0 %v2318
      %2374 = vmatprep.subr.mxu0 0.0
      %2375 = vmatpush1.msra.mxu0 %v2319
      %2376 = vmatprep.subr.mxu0 0.0
      %2377 = vmatpush1.msra.mxu0 %v2320
      %2378 = vmatprep.subr.mxu0 0.0
      %2379 = vmatpush1.msra.mxu0 %v2321
      %2380 = vmatprep.subr.mxu0 0.0
      %2381 = vmatpush1.msra.mxu0 %v2322
      %2382 = vmatprep.subr.mxu0 0.0
      %2383 = vmatpush1.msra.mxu0 %v2323
      %2384 = vmatprep.subr.mxu0 0.0
      %2385 = vmatpush1.msra.mxu0 %v2324
      %2386 = vmatprep.subr.mxu0 0.0
      %2387 = vmatpush1.msra.mxu0 %v2325
      %2388 = vmatprep.subr.mxu0 0.0
      %2389 = vmatpush1.msra.mxu0 %v2326
      %2390 = vmatprep.subr.mxu0 0.0
      %2391 = vmatpush1.msra.mxu0 %v2327
      %2392 = vmatprep.mubr.f32.mxu0 1.0
      %2393 = vmatmul.mubr.f32.gmra.mrb[0].mxu0 1.0
      %v2394 = vpop.f32.mrb[0].mxu0
      %v2395 = vadd.f32 0.0, %v2394
      %v2396 = vpop.f32.mrb[0].mxu0
      %2397 = vdwg.mxu0
      %v2398 = vadd.f32 %v2295, %v2395
      %2399 = vst.msk [vmem:[%s232] sm:$0x1] %vm2293, %v2398
      %vm2400 = vcmask 130048
      %2401 = vst.msk [vmem:[%s224] sm:$0xff] %vm2400, %v2063
      %2402 = vst.msk [vmem:[%s224 + $0x8] sm:$0xff] %vm2400, %v2068
      %2403 = vst.msk [vmem:[%s224 + $0x10] sm:$0xff] %vm2400, %v2073
      %2404 = vst.msk [vmem:[%s224 + $0x18] sm:$0xff] %vm2400, %v2078
      %2405 = vst.msk [vmem:[%s224 + $0x20] sm:$0xff] %vm2400, %v2083
      %2406 = vst.msk [vmem:[%s224 + $0x28] sm:$0xff] %vm2400, %v2088
      %2407 = vst.msk [vmem:[%s224 + $0x30] sm:$0xff] %vm2400, %v2093
      %2408 = vst.msk [vmem:[%s224 + $0x38] sm:$0xff] %vm2400, %v2098
      %2409 = vst.msk [vmem:[%s224 + $0x40] sm:$0xff] %vm2400, %v2103
      %2410 = vst.msk [vmem:[%s224 + $0x48] sm:$0xff] %vm2400, %v2108
      %2411 = vst.msk [vmem:[%s224 + $0x50] sm:$0xff] %vm2400, %v2113
      %2412 = vst.msk [vmem:[%s224 + $0x58] sm:$0xff] %vm2400, %v2118
      %2413 = vst.msk [vmem:[%s224 + $0x60] sm:$0xff] %vm2400, %v2123
      %2414 = vst.msk [vmem:[%s224 + $0x68] sm:$0xff] %vm2400, %v2128
      %2415 = vst.msk [vmem:[%s224 + $0x70] sm:$0xff] %vm2400, %v2133
      %2416 = vst.msk [vmem:[%s224 + $0x78] sm:$0xff] %vm2400, %v2138
      %2417 = vst.msk [vmem:[%s224 + $0x80] sm:$0xff] %vm2400, %v2143
      %2418 = vst.msk [vmem:[%s224 + $0x88] sm:$0xff] %vm2400, %v2148
      %2419 = vst.msk [vmem:[%s224 + $0x90] sm:$0xff] %vm2400, %v2153
      %2420 = vst.msk [vmem:[%s224 + $0x98] sm:$0xff] %vm2400, %v2158
      %2421 = vst.msk [vmem:[%s224 + $0xa0] sm:$0xff] %vm2400, %v2163
      %2422 = vst.msk [vmem:[%s224 + $0xa8] sm:$0xff] %vm2400, %v2168
      %2423 = vst.msk [vmem:[%s224 + $0xb0] sm:$0xff] %vm2400, %v2173
      %2424 = vst.msk [vmem:[%s224 + $0xb8] sm:$0xff] %vm2400, %v2178
      %2425 = vst.msk [vmem:[%s224 + $0xc0] sm:$0xff] %vm2400, %v2183
      %2426 = vst.msk [vmem:[%s224 + $0xc8] sm:$0xff] %vm2400, %v2188
      %2427 = vst.msk [vmem:[%s224 + $0xd0] sm:$0xff] %vm2400, %v2193
      %2428 = vst.msk [vmem:[%s224 + $0xd8] sm:$0xff] %vm2400, %v2198
      %2429 = vst.msk [vmem:[%s224 + $0xe0] sm:$0xff] %vm2400, %v2203
      %2430 = vst.msk [vmem:[%s224 + $0xe8] sm:$0xff] %vm2400, %v2208
      %2431 = vst.msk [vmem:[%s224 + $0xf0] sm:$0xff] %vm2400, %v2213
      %2432 = vst.msk [vmem:[%s224 + $0xf8] sm:$0xff] %vm2400, %v2218
      %s2433 = sadd.s32 %s20, %s21
      %s2434 = smul.u32 32, %s2433
      %p2435 = scmp.lt.s32.totalorder %s2434, 63
      %s2436 = scalar_select %p2435, %s2434, 63
      %s2437 = smul.addr %s2436, 8
      %s2438 = scalar_lea.vmem %s2, %s2437
      %p2439 = scmp.lt.s32.totalorder %s20, 1
      %s2440 = scalar_select %p2439, %s20, 1
      %s2441 = scalar_lea.vmem %s3, %s2440
      %p2442 = scmp.lt.s32.totalorder %s20, 1
      %s2443 = scalar_select %p2442, %s20, 1
      %s2444 = scalar_lea.vmem %s4, %s2443
      // Predicated region
      $region33: #{cbl_forward.2} parent=27 // pred_check
        %p2445 = pneg %p95
      $region34: #{cbl_forward.2} parent=27 // pred_check_branch
        %2447 = sbr.rel (%p2445) target = $region36
      $region35: #{cbl_forward.2} parent=27 // pred_region
        %s2448 = sadd.s32 %s20, %s21
        %s2449 = smul.u32 32, %s2448
      $region36: #{cbl_forward.2} parent=27 // pred_fallthru
        _
      // Predicated region
      $region37: #{cbl_forward.2} parent=27 // pred_check
        %p2450 = pneg %p121
      $region38: #{cbl_forward.2} parent=27 // pred_check_branch
        %2452 = sbr.rel (%p2450) target = $region40
      $region39: #{cbl_forward.2} parent=27 // pred_region
        _
      $region40: #{cbl_forward.2} parent=27 // pred_fallthru
        _
      // Predicated region
      $region41: #{cbl_forward.2} parent=27 // pred_check
        %p2453 = pneg %p147
      $region42: #{cbl_forward.2} parent=27 // pred_check_branch
        %2455 = sbr.rel (%p2453) target = $region44
      $region43: #{cbl_forward.2} parent=27 // pred_region
        _
      $region44: #{cbl_forward.2} parent=27 // pred_fallthru
        _
    $region28: #{cbl_forward.2} parent=5 // pred_fallthru
      _
    %p2456 = scmp.le.s32.totalorder 2, %s11
    // Predicated region
    $region45: #{cbl_forward.2} parent=5 // pred_check
      %p2457 = pneg %p2456
    $region46: #{cbl_forward.2} parent=5 // pred_check_branch
      %2459 = sbr.rel (%p2457) target = $region48
    $region47: #{cbl_forward.2} parent=5 // pred_region
      %s2460 = ssub.s32 %s11, 2
      // Predicated region
      $region49: #{cbl_forward.2} parent=47 // pred_check
        %p2461 = pneg %p101
      $region50: #{cbl_forward.2} parent=47 // pred_check_branch
        %2463 = sbr.rel (%p2461) target = $region52
      $region51: #{cbl_forward.2} parent=47 // pred_region
        %s2464 = sadd.s32 %s22, %s23
        %s2465 = smul.u32 32, %s2464
        %p2466 = scmp.lt.s32.totalorder %s2465, 63
        %s2467 = scalar_select %p2466, %s2465, 63
        %s2468 = smul.addr %s2467, 8
        %s2469 = scalar_lea.vmem %s2, %s2468
      $region52: #{cbl_forward.2} parent=47 // pred_fallthru
        _
      // Predicated region
      $region53: #{cbl_forward.2} parent=47 // pred_check
        %p2470 = pneg %p127
      $region54: #{cbl_forward.2} parent=47 // pred_check_branch
        %2472 = sbr.rel (%p2470) target = $region56
      $region55: #{cbl_forward.2} parent=47 // pred_region
        %p2473 = scmp.lt.s32.totalorder %s22, 1
        %s2474 = scalar_select %p2473, %s22, 1
        %s2475 = scalar_lea.vmem %s3, %s2474
      $region56: #{cbl_forward.2} parent=47 // pred_fallthru
        _
      // Predicated region
      $region57: #{cbl_forward.2} parent=47 // pred_check
        %p2476 = pneg %p153
      $region58: #{cbl_forward.2} parent=47 // pred_check_branch
        %2478 = sbr.rel (%p2476) target = $region60
      $region59: #{cbl_forward.2} parent=47 // pred_region
        %p2479 = scmp.lt.s32.totalorder %s22, 1
        %s2480 = scalar_select %p2479, %s22, 1
        %s2481 = scalar_lea.vmem %s4, %s2480
      $region60: #{cbl_forward.2} parent=47 // pred_fallthru
        _
    $region48: #{cbl_forward.2} parent=5 // pred_fallthru
      _
  $region6: #{cbl_forward.2} parent=0 // loop_footer
    %s15 = sadd.s32 1, %s11
  $region7: #{cbl_forward.2} parent=0 // loop_footer_branch
    %10 = sbr.rel target = $region3
  $region8: #{cbl_forward.2} parent=0 // loop_exit
    _

</llo_original>
